<compile_context>
chip_gen: v6e
topology: v6e:2x2x1
jax: 0.10.0
libtpu: 0.0.40
codegen_flags: <defaults>
</compile_context>

<pallas_src>
import functools

import jax
import jax.numpy as jnp
import numpy as np
from jax.experimental import pallas as pl
from jax.experimental.pallas import tpu as pltpu


def _round_up(n, m):
    return ((n + m - 1) // m) * m


def _pick_tb(batch, per_row_bytes, const_bytes):
    """Batch-tile size: multiple of 8, generation-aware VMEM budget, ~4 steps."""
    try:
        kind = jax.devices()[0].device_kind.lower()
    except Exception:  # defensive: fall back to the most conservative budget
        kind = "v5"
    if "v5" in kind:
        # v5e scoped-VMEM default is 16 MiB -> stay under it without flags.
        vmem_budget = 12 * 1024 * 1024
    else:
        # v6e: 32 MiB scoped default / 128 MiB physical.
        # v7x: 64 MiB physical split over 2 TCs -> 20 MiB per-TC keeps both fed.
        vmem_budget = 20 * 1024 * 1024
    cap = (vmem_budget - const_bytes) // max(per_row_bytes, 1)
    cap = max(8, (cap // 8) * 8)
    cap = min(cap, 1024)              # 512-1024 rows ~ measured HBM-roofline sweet spot
    if batch <= 8:
        want = 8                      # tiny batch: single fused step
    else:
        # target ~4 grid steps (real pipeline overlap) and guarantee >= 2 steps
        # for batch > 8 so both v7x TensorCores get work.
        want = _round_up(pl.cdiv(batch, 4), 8)
    return int(min(cap, max(8, want)))


def _const_spec(block_shape):
    """BlockSpec for a grid-invariant operand: fetched once, single-buffered."""
    index_map = lambda i: (0,) * len(block_shape)
    try:
        return pl.BlockSpec(block_shape, index_map, pipeline_mode=pl.Buffered(1))
    except Exception:  # older jax without pipeline_mode / Buffered support
        return pl.BlockSpec(block_shape, index_map)


def decoder_kernel(x_ref, y_ref, mconv_ref, bct_ref, wdec_ref, blt_ref,
                   enc_ref, dec_ref, *, h_out, w_dm_pad):
    """Fused conv(4,1) + height-max + bias/ReLU, and linear2, per batch tile.

    x_ref    : (TB, window*m1) f32          flat x, x[b, w*m1 + j] == x[b, w, j]
    y_ref    : (TB, T) f32                  y_prev squeezed (in_features == 1)
    mconv_ref: (window*m1, h_out*w_dm_pad) bf16   block-diag im2col*conv weight
    bct_ref  : (1, w_dm_pad) f32            conv bias tiled over window (0-padded)
    wdec_ref : (T, t_dm_pad) bf16           block-diag linear2 weight
    blt_ref  : (1, t_dm_pad) f32            linear2 bias tiled over T (0-padded)
    enc_ref  : (TB, w_dm_pad) f32           lane-dense enc_input slab
    dec_ref  : (TB, t_dm_pad) f32           lane-dense dec_output slab
    """
    # bf16 cast inside the kernel (cheap VPU work, hidden) -> native bf16 MXU.
    x = x_ref[...].astype(jnp.bfloat16)                       # (TB, window*m1)

    # Height-max fused into the matmul: h_out accumulating matmuls folded with
    # jnp.maximum; only a (TB, w_dm_pad) accumulator stays live (no conv slab).
    acc = jnp.dot(x, mconv_ref[:, :w_dm_pad],
                  preferred_element_type=jnp.float32)
    for h in range(1, h_out):                                 # small static unroll
        acc = jnp.maximum(
            acc,
            jnp.dot(x, mconv_ref[:, h * w_dm_pad:(h + 1) * w_dm_pad],
                    preferred_element_type=jnp.float32))

    # bias + ReLU after the max (bias constant over h, ReLU monotone => equal);
    # dropout1 is identity at inference time.
    enc_ref[...] = jnp.maximum(acc + bct_ref[...], 0.0).astype(enc_ref.dtype)

    # linear2 (in_features = 1) as a block-diagonal matmul producing the
    # lane-dense (TB, t_dm_pad) dec slab directly.
    y = y_ref[...].astype(jnp.bfloat16)                       # (TB, T)
    dec = jnp.dot(y, wdec_ref[...], preferred_element_type=jnp.float32)
    dec_ref[...] = (dec + blt_ref[...]).astype(dec_ref.dtype)


def build_decoder_operators(wc, bc, wl, bl, *, window, n_multiv, T):
    """Fold transpose + im2col + conv2 and linear2 into lane-dense bf16 operators.

    Run ONCE at init (hoisted out of the per-call hot path).
      wc: (KH, d_model) == torch conv2.weight[c, 0, k, 0] transposed to [k, c]
      bc: (d_model,) or (1, d_model)  conv2 bias
      wl: (d_model,) or (1, d_model)  linear2 weight (in_features = 1)
      bl: (d_model,) or (1, d_model)  linear2 bias
    """
    wc = np.asarray(wc, np.float32)
    bc = np.asarray(bc, np.float32).reshape(-1)
    wl = np.asarray(wl, np.float32).reshape(-1)
    bl = np.asarray(bl, np.float32).reshape(-1)
    KH, dm = wc.shape
    m1 = n_multiv + 1
    h_out = m1 - KH + 1
    w_dm = window * dm
    w_dm_pad = _round_up(w_dm, 128)   # unmasked stores / aligned per-h maxima
    t_dm = T * dm
    t_dm_pad = _round_up(t_dm, 128)

    # Mconv[w*m1 + j, h*w_dm_pad + w*dm + c] = wc[j - h, c] for h <= j < h + KH
    mconv = np.zeros((window * m1, h_out * w_dm_pad), np.float32)
    for h in range(h_out):
        for w in range(window):
            col0 = h * w_dm_pad + w * dm
            for k in range(KH):
                mconv[w * m1 + h + k, col0:col0 + dm] = wc[k]

    bct = np.zeros((1, w_dm_pad), np.float32)
    bct[0, :w_dm] = np.tile(bc, window)

    # Wdec[t, t*dm + c] = wl[c]  (block-diagonal fold of Linear(1, d_model))
    wdec = np.zeros((T, t_dm_pad), np.float32)
    for t in range(T):
        wdec[t, t * dm:(t + 1) * dm] = wl
    blt = np.zeros((1, t_dm_pad), np.float32)
    blt[0, :t_dm] = np.tile(bl, T)

    return (jnp.asarray(mconv, jnp.bfloat16), jnp.asarray(bct, jnp.float32),
            jnp.asarray(wdec, jnp.bfloat16), jnp.asarray(blt, jnp.float32))


@functools.partial(jax.jit, static_argnames=("d_model",))
def decoder_forward(x, y_prev, mconv, bct, wdec, blt, *, d_model):
    """x: (B, window, n_multiv+1), y_prev: (B, T, 1) -> (enc_input, dec_output)."""
    B, window, m1 = x.shape
    T = y_prev.shape[1]
    dm = d_model
    w_dm = window * dm
    w_dm_pad = bct.shape[1]
    t_dm = T * dm
    t_dm_pad = blt.shape[1]
    h_out = mconv.shape[1] // w_dm_pad

    # Free layout plumbing: contiguous reshapes only (no transpose, no cast).
    x2 = x.reshape(B, window * m1)
    y2 = y_prev.reshape(B, T)

    # Generation-aware batch tiling.
    per_row = (2 * 4 * (window * m1 + T + w_dm_pad + t_dm_pad)   # dbl-buffered I/O
               + 4 * (2 * w_dm_pad + t_dm_pad)                   # live f32 intermediates
               + 2 * (window * m1 + T))                          # in-kernel bf16 casts
    const_bytes = 2 * (mconv.size + wdec.size) + 4 * (bct.size + blt.size)
    tb = _pick_tb(B, per_row, const_bytes)
    b_pad = pl.cdiv(B, tb) * tb
    if b_pad != B:
        x2 = jnp.pad(x2, ((0, b_pad - B), (0, 0)))
        y2 = jnp.pad(y2, ((0, b_pad - B), (0, 0)))

    enc_flat, dec_flat = pl.pallas_call(
        functools.partial(decoder_kernel, h_out=h_out, w_dm_pad=w_dm_pad),
        out_shape=(
            jax.ShapeDtypeStruct((b_pad, w_dm_pad), jnp.float32),
            jax.ShapeDtypeStruct((b_pad, t_dm_pad), jnp.float32),
        ),
        grid_spec=pltpu.PrefetchScalarGridSpec(
            num_scalar_prefetch=0,
            grid=(b_pad // tb,),
            in_specs=[
                pl.BlockSpec((tb, window * m1), lambda i: (i, 0)),
                pl.BlockSpec((tb, T), lambda i: (i, 0)),
                # grid-invariant operands: fetched once, single-buffered
                _const_spec((window * m1, h_out * w_dm_pad)),
                _const_spec((1, w_dm_pad)),
                _const_spec((T, t_dm_pad)),
                _const_spec((1, t_dm_pad)),
            ],
            out_specs=[
                pl.BlockSpec((tb, w_dm_pad), lambda i: (i, 0)),
                pl.BlockSpec((tb, t_dm_pad), lambda i: (i, 0)),
            ],
        ),
        compiler_params=pltpu.CompilerParams(
            dimension_semantics=("parallel",)),
    )(x2, y2, mconv, bct, wdec, blt)

    # TODO(synk): flip out_shape dtypes to bf16 if downstream tolerates it
    #             (halves the dominant HBM writeback term of this kernel).
    enc = enc_flat[:B, :w_dm].reshape(B, window, dm)
    dec = dec_flat[:B, :t_dm].reshape(B, T, dm)
    return enc, dec


def reference(x, y_prev, wc, bc, wl, bl):
    """Pure-JAX f32 reference matching the PyTorch forward (eval mode)."""
    xt = jnp.transpose(x, (0, 2, 1))                   # (B, n_multiv+1, window)
    KH = wc.shape[0]
    H_out = xt.shape[1] - KH + 1
    convs = []
    for h in range(H_out):
        patch = xt[:, h:h + KH, :]                     # (B, KH, W)
        convs.append(jnp.einsum("bkw,kc->bwc", patch, wc) + bc)
    conv = jnp.maximum(jnp.stack(convs, axis=1), 0.0)  # relu
    enc = conv.max(axis=1)                             # adaptive max pool over height
    dec = y_prev @ wl + bl
    return enc, dec


if __name__ == "__main__":
    # Small shapes consistent with the module's forward.
    B, window, n_multiv, d_model, T, KH = 2, 16, 7, 32, 8, 4

    key = jax.random.PRNGKey(0)
    k1, k2, k3, k4, k5, k6 = jax.random.split(key, 6)
    x = jax.random.normal(k1, (B, window, n_multiv + 1), dtype=jnp.float32)
    y_prev = jax.random.normal(k2, (B, T, 1), dtype=jnp.float32)

    # Deterministic synthetic parameters (shapes from __init__):
    #   conv2: Conv2d(1, d_model, (4, 1)) -> weight (d_model,1,4,1), bias (d_model,)
    #   linear2: Linear(1, d_model)       -> weight (d_model,1),    bias (d_model,)
    wc = 0.2 * jax.random.normal(k3, (KH, d_model), dtype=jnp.float32)
    bc = 0.1 * jax.random.normal(k4, (1, d_model), dtype=jnp.float32)
    wl = 0.2 * jax.random.normal(k5, (1, d_model), dtype=jnp.float32)
    bl = 0.1 * jax.random.normal(k6, (1, d_model), dtype=jnp.float32)

    # Hoisted (init-time) operator construction -- NOT in the per-call path.
    mconv, bct, wdec, blt = build_decoder_operators(
        wc, bc, wl, bl, window=window, n_multiv=n_multiv, T=T)

    enc, dec = decoder_forward(x, y_prev, mconv, bct, wdec, blt,
                               d_model=d_model)
    jax.block_until_ready((enc, dec))

    enc_r, dec_r = reference(x, y_prev, wc, bc, wl, bl)
    # bf16 MXU operands (f32 accumulation) -> loosened tolerance vs f32 ref.
    np.testing.assert_allclose(np.asarray(enc), np.asarray(enc_r),
                               rtol=2e-2, atol=2e-2)
    np.testing.assert_allclose(np.asarray(dec), np.asarray(dec_r),
                               rtol=2e-2, atol=2e-2)
    print("KERNEL_OK")
</pallas_src>

<mosaic_0001>
module attributes {stable_mosaic.version = 11 : i64} {
  func.func @decoder_kernel(%arg0: i32, %arg1: memref<8x128xf32, #tpu.memory_space<vmem>>, %arg2: memref<8x8xf32, #tpu.memory_space<vmem>>, %arg3: memref<128x2560xbf16, #tpu.memory_space<vmem>>, %arg4: memref<1x512xf32, #tpu.memory_space<vmem>>, %arg5: memref<8x256xbf16, #tpu.memory_space<vmem>>, %arg6: memref<1x256xf32, #tpu.memory_space<vmem>>, %arg7: memref<8x512xf32, #tpu.memory_space<vmem>>, %arg8: memref<8x256xf32, #tpu.memory_space<vmem>>) attributes {dimension_semantics = [#tpu.dimension_semantics<parallel>], iteration_bounds = array<i64: 1>, scalar_prefetch = 0 : i64, scratch_operands = 0 : i64, tpu.core_type = #tpu.core_type<tc>, window_params = [{transform_indices = @transform_0, window_bounds = array<i64: 8, 128>}, {transform_indices = @transform_1, window_bounds = array<i64: 8, 8>}, {pipeline_mode = #tpu.pipeline_mode<synchronous>, transform_indices = @transform_2, window_bounds = array<i64: 128, 2560>}, {pipeline_mode = #tpu.pipeline_mode<synchronous>, transform_indices = @transform_3, window_bounds = array<i64: 1, 512>}, {pipeline_mode = #tpu.pipeline_mode<synchronous>, transform_indices = @transform_4, window_bounds = array<i64: 8, 256>}, {pipeline_mode = #tpu.pipeline_mode<synchronous>, transform_indices = @transform_5, window_bounds = array<i64: 1, 256>}, {transform_indices = @transform_6, window_bounds = array<i64: 8, 512>}, {transform_indices = @transform_7, window_bounds = array<i64: 8, 256>}]} {
    %c0 = arith.constant 0 : index
    %c0_0 = arith.constant 0 : index
    %0 = vector.load %arg1[%c0, %c0_0] : memref<8x128xf32, #tpu.memory_space<vmem>>, vector<8x128xf32>
    %1 = arith.truncf %0 : vector<8x128xf32> to vector<8x128xbf16>
    %c0_1 = arith.constant 0 : index
    %c0_2 = arith.constant 0 : index
    %2 = vector.load %arg3[%c0_1, %c0_2] : memref<128x2560xbf16, #tpu.memory_space<vmem>>, vector<128x512xbf16>
    %cst = arith.constant dense<0.000000e+00> : vector<8x512xf32>
    %3 = tpu.matmul %1, %2, %cst {dimension_numbers = #tpu.dot_dimension_numbers<[1], [0], [0], [1], [0, 0, 1, 1], [], []>} : vector<8x128xbf16>, vector<128x512xbf16>, vector<8x512xf32> -> vector<8x512xf32>
    %c0_3 = arith.constant 0 : index
    %c512 = arith.constant 512 : index
    %4 = vector.load %arg3[%c0_3, %c512] : memref<128x2560xbf16, #tpu.memory_space<vmem>>, vector<128x512xbf16>
    %cst_4 = arith.constant dense<0.000000e+00> : vector<8x512xf32>
    %5 = tpu.matmul %1, %4, %cst_4 {dimension_numbers = #tpu.dot_dimension_numbers<[1], [0], [0], [1], [0, 0, 1, 1], [], []>} : vector<8x128xbf16>, vector<128x512xbf16>, vector<8x512xf32> -> vector<8x512xf32>
    %6 = arith.maximumf %3, %5 : vector<8x512xf32>
    %c0_5 = arith.constant 0 : index
    %c1024 = arith.constant 1024 : index
    %7 = vector.load %arg3[%c0_5, %c1024] : memref<128x2560xbf16, #tpu.memory_space<vmem>>, vector<128x512xbf16>
    %cst_6 = arith.constant dense<0.000000e+00> : vector<8x512xf32>
    %8 = tpu.matmul %1, %7, %cst_6 {dimension_numbers = #tpu.dot_dimension_numbers<[1], [0], [0], [1], [0, 0, 1, 1], [], []>} : vector<8x128xbf16>, vector<128x512xbf16>, vector<8x512xf32> -> vector<8x512xf32>
    %9 = arith.maximumf %6, %8 : vector<8x512xf32>
    %c0_7 = arith.constant 0 : index
    %c1536 = arith.constant 1536 : index
    %10 = vector.load %arg3[%c0_7, %c1536] : memref<128x2560xbf16, #tpu.memory_space<vmem>>, vector<128x512xbf16>
    %cst_8 = arith.constant dense<0.000000e+00> : vector<8x512xf32>
    %11 = tpu.matmul %1, %10, %cst_8 {dimension_numbers = #tpu.dot_dimension_numbers<[1], [0], [0], [1], [0, 0, 1, 1], [], []>} : vector<8x128xbf16>, vector<128x512xbf16>, vector<8x512xf32> -> vector<8x512xf32>
    %12 = arith.maximumf %9, %11 : vector<8x512xf32>
    %c0_9 = arith.constant 0 : index
    %c2048 = arith.constant 2048 : index
    %13 = vector.load %arg3[%c0_9, %c2048] : memref<128x2560xbf16, #tpu.memory_space<vmem>>, vector<128x512xbf16>
    %cst_10 = arith.constant dense<0.000000e+00> : vector<8x512xf32>
    %14 = tpu.matmul %1, %13, %cst_10 {dimension_numbers = #tpu.dot_dimension_numbers<[1], [0], [0], [1], [0, 0, 1, 1], [], []>} : vector<8x128xbf16>, vector<128x512xbf16>, vector<8x512xf32> -> vector<8x512xf32>
    %15 = arith.maximumf %12, %14 : vector<8x512xf32>
    %c0_11 = arith.constant 0 : index
    %c0_12 = arith.constant 0 : index
    %16 = vector.load %arg4[%c0_11, %c0_12] : memref<1x512xf32, #tpu.memory_space<vmem>>, vector<1x512xf32>
    %17 = vector.broadcast %16 : vector<1x512xf32> to vector<8x512xf32>
    %18 = arith.addf %15, %17 : vector<8x512xf32>
    %cst_13 = arith.constant 0.000000e+00 : f32
    %19 = vector.broadcast %cst_13 : f32 to vector<8x512xf32>
    %20 = arith.maximumf %18, %19 : vector<8x512xf32>
    %c0_14 = arith.constant 0 : index
    %c0_15 = arith.constant 0 : index
    %21 = vector.load %arg7[%c0_14, %c0_15] : memref<8x512xf32, #tpu.memory_space<vmem>>, vector<8x512xf32>
    tpu.vector_store %arg7[%c0_14, %c0_15], %20 {strides = array<i32>} : memref<8x512xf32, #tpu.memory_space<vmem>>, vector<8x512xf32>,
    %c0_16 = arith.constant 0 : index
    %c0_17 = arith.constant 0 : index
    %22 = vector.load %arg2[%c0_16, %c0_17] : memref<8x8xf32, #tpu.memory_space<vmem>>, vector<8x8xf32>
    %23 = arith.truncf %22 : vector<8x8xf32> to vector<8x8xbf16>
    %c0_18 = arith.constant 0 : index
    %c0_19 = arith.constant 0 : index
    %24 = vector.load %arg5[%c0_18, %c0_19] : memref<8x256xbf16, #tpu.memory_space<vmem>>, vector<8x256xbf16>
    %cst_20 = arith.constant dense<0.000000e+00> : vector<8x256xf32>
    %25 = tpu.matmul %23, %24, %cst_20 {dimension_numbers = #tpu.dot_dimension_numbers<[1], [0], [0], [1], [0, 0, 1, 1], [], []>} : vector<8x8xbf16>, vector<8x256xbf16>, vector<8x256xf32> -> vector<8x256xf32>
    %c0_21 = arith.constant 0 : index
    %c0_22 = arith.constant 0 : index
    %26 = vector.load %arg6[%c0_21, %c0_22] : memref<1x256xf32, #tpu.memory_space<vmem>>, vector<1x256xf32>
    %27 = vector.broadcast %26 : vector<1x256xf32> to vector<8x256xf32>
    %28 = arith.addf %25, %27 : vector<8x256xf32>
    %c0_23 = arith.constant 0 : index
    %c0_24 = arith.constant 0 : index
    %29 = vector.load %arg8[%c0_23, %c0_24] : memref<8x256xf32, #tpu.memory_space<vmem>>, vector<8x256xf32>
    tpu.vector_store %arg8[%c0_23, %c0_24], %28 {strides = array<i32>} : memref<8x256xf32, #tpu.memory_space<vmem>>, vector<8x256xf32>,
    return
  }
  func.func @transform_0(%arg0: i32) -> (i32, i32) {
    %c0_i32 = arith.constant 0 : i32
    %c0_i32_0 = arith.constant 0 : i32
    return %arg0, %c0_i32 : i32, i32
  }
  func.func @transform_1(%arg0: i32) -> (i32, i32) {
    %c0_i32 = arith.constant 0 : i32
    %c0_i32_0 = arith.constant 0 : i32
    return %arg0, %c0_i32 : i32, i32
  }
  func.func @transform_2(%arg0: i32) -> (i32, i32) {
    %c0_i32 = arith.constant 0 : i32
    %c0_i32_0 = arith.constant 0 : i32
    %c0_i32_1 = arith.constant 0 : i32
    return %c0_i32, %c0_i32_0 : i32, i32
  }
  func.func @transform_3(%arg0: i32) -> (i32, i32) {
    %c0_i32 = arith.constant 0 : i32
    %c0_i32_0 = arith.constant 0 : i32
    %c0_i32_1 = arith.constant 0 : i32
    return %c0_i32, %c0_i32_0 : i32, i32
  }
  func.func @transform_4(%arg0: i32) -> (i32, i32) {
    %c0_i32 = arith.constant 0 : i32
    %c0_i32_0 = arith.constant 0 : i32
    %c0_i32_1 = arith.constant 0 : i32
    return %c0_i32, %c0_i32_0 : i32, i32
  }
  func.func @transform_5(%arg0: i32) -> (i32, i32) {
    %c0_i32 = arith.constant 0 : i32
    %c0_i32_0 = arith.constant 0 : i32
    %c0_i32_1 = arith.constant 0 : i32
    return %c0_i32, %c0_i32_0 : i32, i32
  }
  func.func @transform_6(%arg0: i32) -> (i32, i32) {
    %c0_i32 = arith.constant 0 : i32
    %c0_i32_0 = arith.constant 0 : i32
    return %arg0, %c0_i32 : i32, i32
  }
  func.func @transform_7(%arg0: i32) -> (i32, i32) {
    %c0_i32 = arith.constant 0 : i32
    %c0_i32_0 = arith.constant 0 : i32
    return %arg0, %c0_i32 : i32, i32
  }
}

</mosaic_0001>

<llo_original>
// kernel: decoder_forward.1
$region0: #{decoder_forward.1}
  #allocation0 [shape = 'u32[]', space=smem, size = 0x4, offset = 0x4, fixed_abs, tag = 'smem constant byte address 0x4 - core index']
  #allocation1 [shape = 'u32[144,128]{1,0:T(1,128)}', space=vmem, size = 0x12000, scoped, tag = 'internal scratch']
  %s0 = inlined_call_operand.vmem [shape: f32[8,128], index: 0, kind: input, shape index: {}]
  %s1 = inlined_call_operand.vmem [shape: f32[8,8], index: 1, kind: input, shape index: {}]
  %s2 = inlined_call_operand.hbm [shape: bf16[128,2560], index: 2, kind: input, shape index: {}]
  %s3 = inlined_call_operand.vmem [shape: f32[1,512], index: 3, kind: input, shape index: {}]
  %s4 = inlined_call_operand.vmem [shape: bf16[8,256], index: 4, kind: input, shape index: {}]
  %s5 = inlined_call_operand.vmem [shape: f32[1,256], index: 5, kind: input, shape index: {}]
  %s6 = inlined_call_operand.vmem [shape: f32[8,512], index: 6, kind: output, shape index: {0}]
  %s7 = inlined_call_operand.vmem [shape: f32[8,256], index: 7, kind: output, shape index: {1}]
  %8 = xla_tuple %s6, %s7
  %s9 = sld [smem:[#allocation0]]
  $region46: #{decoder_forward.1} parent=0
    _
  %s11 = ssub.s32 1, %s9
  %s12 = scalar_select 0, %s11, %s9
  $region1: #{decoder_forward.1} parent=0
    #allocation2 [shape = 'u8[655360]{0}', space=vmem, size = 0xa0000, scoped, tag = 'input window, operand 2, single buffered']
    #allocation3 [shape = 's32[1]{0}', space=sflag, size = 0x4, scoped, tag = 'scoped memory for decoder_forward.1']
    %13 = vsyncpa [#allocation3], 0
    // Predicated region
    $region2: #{decoder_forward.1} parent=1 // pred_check
      _
    $region3: #{decoder_forward.1} parent=1 // pred_check_branch
      %15 = sbr.rel (0) target = $region5
    $region4: #{decoder_forward.1} parent=1 // pred_region
      _
    $region5: #{decoder_forward.1} parent=1 // pred_fallthru
      _
    // Predicated region
    $region6: #{decoder_forward.1} parent=1 // pred_check
      _
    $region7: #{decoder_forward.1} parent=1 // pred_check_branch
      %17 = sbr.rel (0) target = $region9
    $region8: #{decoder_forward.1} parent=1 // pred_region
      _
    $region9: #{decoder_forward.1} parent=1 // pred_fallthru
      _
    // Predicated region
    $region10: #{decoder_forward.1} parent=1 // pred_check
      _
    $region11: #{decoder_forward.1} parent=1 // pred_check_branch
      %19 = sbr.rel (0) target = $region13
    $region12: #{decoder_forward.1} parent=1 // pred_region
      %s21 = ssub.s32 20480, 20480
      %22 = vsyncadd [#allocation3], %s21
      %s23 = sshll.u32 [#allocation2], 4
      %s24 = int_to_ptr.vmem [resolvable:$true] %s23
      %29 = dma.hbm_to_vmem [thread:$0]  %s2, 20480, %s24, [#allocation3], 1280, 1280, 80
    $region13: #{decoder_forward.1} parent=1 // pred_fallthru
      _
    // Predicated region
    $region14: #{decoder_forward.1} parent=1 // pred_check
      _
    $region15: #{decoder_forward.1} parent=1 // pred_check_branch
      %31 = sbr.rel (0) target = $region17
    $region16: #{decoder_forward.1} parent=1 // pred_region
      _
    $region17: #{decoder_forward.1} parent=1 // pred_fallthru
      _
    // Predicated region
    $region18: #{decoder_forward.1} parent=1 // pred_check
      _
    $region19: #{decoder_forward.1} parent=1 // pred_check_branch
      %33 = sbr.rel (0) target = $region21
    $region20: #{decoder_forward.1} parent=1 // pred_region
      _
    $region21: #{decoder_forward.1} parent=1 // pred_fallthru
      _
    // Predicated region
    $region22: #{decoder_forward.1} parent=1 // pred_check
      _
    $region23: #{decoder_forward.1} parent=1 // pred_check_branch
      %35 = sbr.rel (0) target = $region25
    $region24: #{decoder_forward.1} parent=1 // pred_region
      _
    $region25: #{decoder_forward.1} parent=1 // pred_fallthru
      _
    // Predicated region
    $region26: #{decoder_forward.1} parent=1 // pred_check
      _
    $region27: #{decoder_forward.1} parent=1 // pred_check_branch
      %37 = sbr.rel (0) target = $region29
    $region28: #{decoder_forward.1} parent=1 // pred_region
      %38 = dma.done [#allocation3], 20480
    $region29: #{decoder_forward.1} parent=1 // pred_fallthru
      _
    %v40 = vld [vmem:[%s0] sm:$0xff]
    %v41 = vpack.c.bf16 %v40, %v40
    %v42 = vld [vmem:[#allocation2] sm:$0xff]
    %v43 = vld [vmem:[#allocation2 + $0x8] sm:$0xff]
    %v44 = vld [vmem:[#allocation2 + $0x50] sm:$0xff]
    %v45 = vld [vmem:[#allocation2 + $0x58] sm:$0xff]
    %v46 = vld [vmem:[#allocation2 + $0xa0] sm:$0xff]
    %v47 = vld [vmem:[#allocation2 + $0xa8] sm:$0xff]
    %v48 = vld [vmem:[#allocation2 + $0xf0] sm:$0xff]
    %v49 = vld [vmem:[#allocation2 + $0xf8] sm:$0xff]
    %v50 = vld [vmem:[#allocation2 + $0x140] sm:$0xff]
    %v51 = vld [vmem:[#allocation2 + $0x148] sm:$0xff]
    %v52 = vld [vmem:[#allocation2 + $0x190] sm:$0xff]
    %v53 = vld [vmem:[#allocation2 + $0x198] sm:$0xff]
    %v54 = vld [vmem:[#allocation2 + $0x1e0] sm:$0xff]
    %v55 = vld [vmem:[#allocation2 + $0x1e8] sm:$0xff]
    %v56 = vld [vmem:[#allocation2 + $0x230] sm:$0xff]
    %v57 = vld [vmem:[#allocation2 + $0x238] sm:$0xff]
    %v58 = vld [vmem:[#allocation2 + $0x280] sm:$0xff]
    %v59 = vld [vmem:[#allocation2 + $0x288] sm:$0xff]
    %v60 = vld [vmem:[#allocation2 + $0x2d0] sm:$0xff]
    %v61 = vld [vmem:[#allocation2 + $0x2d8] sm:$0xff]
    %v62 = vld [vmem:[#allocation2 + $0x320] sm:$0xff]
    %v63 = vld [vmem:[#allocation2 + $0x328] sm:$0xff]
    %v64 = vld [vmem:[#allocation2 + $0x370] sm:$0xff]
    %v65 = vld [vmem:[#allocation2 + $0x378] sm:$0xff]
    %v66 = vld [vmem:[#allocation2 + $0x3c0] sm:$0xff]
    %v67 = vld [vmem:[#allocation2 + $0x3c8] sm:$0xff]
    %v68 = vld [vmem:[#allocation2 + $0x410] sm:$0xff]
    %v69 = vld [vmem:[#allocation2 + $0x418] sm:$0xff]
    %v70 = vld [vmem:[#allocation2 + $0x460] sm:$0xff]
    %v71 = vld [vmem:[#allocation2 + $0x468] sm:$0xff]
    %v72 = vld [vmem:[#allocation2 + $0x4b0] sm:$0xff]
    %v73 = vld [vmem:[#allocation2 + $0x4b8] sm:$0xff]
    %v106 = vunpack.c.l.b16 %v42
    %v107 = vunpack.c.h.b16 %v42
    %v108 = vunpack.c.l.b16 %v43
    %v109 = vunpack.c.h.b16 %v43
    %v110 = vunpack.c.l.b16 %v44
    %v111 = vunpack.c.h.b16 %v44
    %v112 = vunpack.c.l.b16 %v45
    %v113 = vunpack.c.h.b16 %v45
    %v114 = vunpack.c.l.b16 %v46
    %v115 = vunpack.c.h.b16 %v46
    %v116 = vunpack.c.l.b16 %v47
    %v117 = vunpack.c.h.b16 %v47
    %v118 = vunpack.c.l.b16 %v48
    %v119 = vunpack.c.h.b16 %v48
    %v120 = vunpack.c.l.b16 %v49
    %v121 = vunpack.c.h.b16 %v49
    %v122 = vunpack.c.l.b16 %v50
    %v123 = vunpack.c.h.b16 %v50
    %v124 = vunpack.c.l.b16 %v51
    %v125 = vunpack.c.h.b16 %v51
    %v126 = vunpack.c.l.b16 %v52
    %v127 = vunpack.c.h.b16 %v52
    %v128 = vunpack.c.l.b16 %v53
    %v129 = vunpack.c.h.b16 %v53
    %v130 = vunpack.c.l.b16 %v54
    %v131 = vunpack.c.h.b16 %v54
    %v132 = vunpack.c.l.b16 %v55
    %v133 = vunpack.c.h.b16 %v55
    %v134 = vunpack.c.l.b16 %v56
    %v135 = vunpack.c.h.b16 %v56
    %v136 = vunpack.c.l.b16 %v57
    %v137 = vunpack.c.h.b16 %v57
    %v138 = vunpack.c.l.b16 %v58
    %v139 = vunpack.c.h.b16 %v58
    %v140 = vunpack.c.l.b16 %v59
    %v141 = vunpack.c.h.b16 %v59
    %v142 = vunpack.c.l.b16 %v60
    %v143 = vunpack.c.h.b16 %v60
    %v144 = vunpack.c.l.b16 %v61
    %v145 = vunpack.c.h.b16 %v61
    %v146 = vunpack.c.l.b16 %v62
    %v147 = vunpack.c.h.b16 %v62
    %v148 = vunpack.c.l.b16 %v63
    %v149 = vunpack.c.h.b16 %v63
    %v150 = vunpack.c.l.b16 %v64
    %v151 = vunpack.c.h.b16 %v64
    %v152 = vunpack.c.l.b16 %v65
    %v153 = vunpack.c.h.b16 %v65
    %v154 = vunpack.c.l.b16 %v66
    %v155 = vunpack.c.h.b16 %v66
    %v156 = vunpack.c.l.b16 %v67
    %v157 = vunpack.c.h.b16 %v67
    %v158 = vunpack.c.l.b16 %v68
    %v159 = vunpack.c.h.b16 %v68
    %v160 = vunpack.c.l.b16 %v69
    %v161 = vunpack.c.h.b16 %v69
    %v162 = vunpack.c.l.b16 %v70
    %v163 = vunpack.c.h.b16 %v70
    %v164 = vunpack.c.l.b16 %v71
    %v165 = vunpack.c.h.b16 %v71
    %v166 = vunpack.c.l.b16 %v72
    %v167 = vunpack.c.h.b16 %v72
    %v168 = vunpack.c.l.b16 %v73
    %v169 = vunpack.c.h.b16 %v73
    %v170 = vpack.c.b16 %v110, %v106
    %v171 = vpack.c.b16 %v111, %v107
    %v172 = vpack.c.b16 %v112, %v108
    %v173 = vpack.c.b16 %v113, %v109
    %v174 = vpack.c.b16 %v118, %v114
    %v175 = vpack.c.b16 %v119, %v115
    %v176 = vpack.c.b16 %v120, %v116
    %v177 = vpack.c.b16 %v121, %v117
    %v178 = vpack.c.b16 %v126, %v122
    %v179 = vpack.c.b16 %v127, %v123
    %v180 = vpack.c.b16 %v128, %v124
    %v181 = vpack.c.b16 %v129, %v125
    %v182 = vpack.c.b16 %v134, %v130
    %v183 = vpack.c.b16 %v135, %v131
    %v184 = vpack.c.b16 %v136, %v132
    %v185 = vpack.c.b16 %v137, %v133
    %v186 = vpack.c.b16 %v142, %v138
    %v187 = vpack.c.b16 %v143, %v139
    %v188 = vpack.c.b16 %v144, %v140
    %v189 = vpack.c.b16 %v145, %v141
    %v190 = vpack.c.b16 %v150, %v146
    %v191 = vpack.c.b16 %v151, %v147
    %v192 = vpack.c.b16 %v152, %v148
    %v193 = vpack.c.b16 %v153, %v149
    %v194 = vpack.c.b16 %v158, %v154
    %v195 = vpack.c.b16 %v159, %v155
    %v196 = vpack.c.b16 %v160, %v156
    %v197 = vpack.c.b16 %v161, %v157
    %v198 = vpack.c.b16 %v166, %v162
    %v199 = vpack.c.b16 %v167, %v163
    %v200 = vpack.c.b16 %v168, %v164
    %v201 = vpack.c.b16 %v169, %v165
    %234 = vmatprep.subr.bf16.mxu0 %v199
    %235 = vmatpush1.bf16.msra.mxu0 %v198
    %236 = vmatprep.subr.bf16.mxu0 %v195
    %237 = vmatpush1.bf16.msra.mxu0 %v194
    %238 = vmatprep.subr.bf16.mxu0 %v191
    %239 = vmatpush1.bf16.msra.mxu0 %v190
    %240 = vmatprep.subr.bf16.mxu0 %v187
    %241 = vmatpush1.bf16.msra.mxu0 %v186
    %242 = vmatprep.subr.bf16.mxu0 %v183
    %243 = vmatpush1.bf16.msra.mxu0 %v182
    %244 = vmatprep.subr.bf16.mxu0 %v179
    %245 = vmatpush1.bf16.msra.mxu0 %v178
    %246 = vmatprep.subr.bf16.mxu0 %v175
    %247 = vmatpush1.bf16.msra.mxu0 %v174
    %248 = vmatprep.subr.bf16.mxu0 %v171
    %249 = vmatpush1.bf16.msra.mxu0 %v170
    %250 = vmatprep.subr.bf16.mxu0 0
    %251 = vmatpush2.bf16.msra.mxu0 0
    %252 = vmatprep.subr.bf16.mxu0 0
    %253 = vmatpush2.bf16.msra.mxu0 0
    %254 = vmatprep.subr.bf16.mxu0 0
    %255 = vmatpush2.bf16.msra.mxu0 0
    %256 = vmatprep.subr.bf16.mxu0 0
    %257 = vmatpush2.bf16.msra.mxu0 0
    %258 = vmatprep.subr.bf16.mxu0 0
    %259 = vmatpush2.bf16.msra.mxu0 0
    %260 = vmatprep.subr.bf16.mxu0 0
    %261 = vmatpush2.bf16.msra.mxu0 0
    %262 = vmatprep.subr.bf16.mxu0 0
    %263 = vmatpush2.bf16.msra.mxu0 0
    %264 = vmatprep.subr.bf16.mxu0 0
    %265 = vmatpush2.bf16.msra.mxu0 0
    %266 = vmatprep.mubr.bf16.mxu0 0
    %267 = vmatmul.mubr.bf16.gmra.mxu0 %v41
    %v268 = vpop.f32.mrf.mxu0
    %v269 = vadd.f32 0.0, %v268
    %v270 = vpop.f32.mrf.mxu0
    %v271 = vadd.f32 0.0, %v270
    %v272 = vpop.f32.mrf.mxu0
    %v273 = vpop.f32.mrf.mxu0
    %274 = vdwg.mxu0
    %275 = vmatprep.subr.bf16.mxu0 %v201
    %276 = vmatpush1.bf16.msra.mxu0 %v200
    %277 = vmatprep.subr.bf16.mxu0 %v197
    %278 = vmatpush1.bf16.msra.mxu0 %v196
    %279 = vmatprep.subr.bf16.mxu0 %v193
    %280 = vmatpush1.bf16.msra.mxu0 %v192
    %281 = vmatprep.subr.bf16.mxu0 %v189
    %282 = vmatpush1.bf16.msra.mxu0 %v188
    %283 = vmatprep.subr.bf16.mxu0 %v185
    %284 = vmatpush1.bf16.msra.mxu0 %v184
    %285 = vmatprep.subr.bf16.mxu0 %v181
    %286 = vmatpush1.bf16.msra.mxu0 %v180
    %287 = vmatprep.subr.bf16.mxu0 %v177
    %288 = vmatpush1.bf16.msra.mxu0 %v176
    %289 = vmatprep.subr.bf16.mxu0 %v173
    %290 = vmatpush1.bf16.msra.mxu0 %v172
    %291 = vmatprep.subr.bf16.mxu0 0
    %292 = vmatpush2.bf16.msra.mxu0 0
    %293 = vmatprep.subr.bf16.mxu0 0
    %294 = vmatpush2.bf16.msra.mxu0 0
    %295 = vmatprep.subr.bf16.mxu0 0
    %296 = vmatpush2.bf16.msra.mxu0 0
    %297 = vmatprep.subr.bf16.mxu0 0
    %298 = vmatpush2.bf16.msra.mxu0 0
    %299 = vmatprep.subr.bf16.mxu0 0
    %300 = vmatpush2.bf16.msra.mxu0 0
    %301 = vmatprep.subr.bf16.mxu0 0
    %302 = vmatpush2.bf16.msra.mxu0 0
    %303 = vmatprep.subr.bf16.mxu0 0
    %304 = vmatpush2.bf16.msra.mxu0 0
    %305 = vmatprep.subr.bf16.mxu0 0
    %306 = vmatpush2.bf16.msra.mxu0 0
    %307 = vmatprep.mubr.bf16.mxu0 0
    %308 = vmatmul.mubr.bf16.gmra.mxu0 %v41
    %v309 = vpop.f32.mrf.mxu0
    %v310 = vadd.f32 0.0, %v309
    %v311 = vpop.f32.mrf.mxu0
    %v312 = vadd.f32 0.0, %v311
    %v313 = vpop.f32.mrf.mxu0
    %v314 = vpop.f32.mrf.mxu0
    %315 = vdwg.mxu0
    %v316 = vld [vmem:[#allocation2 + $0x10] sm:$0xff]
    %v317 = vld [vmem:[#allocation2 + $0x18] sm:$0xff]
    %v318 = vld [vmem:[#allocation2 + $0x60] sm:$0xff]
    %v319 = vld [vmem:[#allocation2 + $0x68] sm:$0xff]
    %v320 = vld [vmem:[#allocation2 + $0xb0] sm:$0xff]
    %v321 = vld [vmem:[#allocation2 + $0xb8] sm:$0xff]
    %v322 = vld [vmem:[#allocation2 + $0x100] sm:$0xff]
    %v323 = vld [vmem:[#allocation2 + $0x108] sm:$0xff]
    %v324 = vld [vmem:[#allocation2 + $0x150] sm:$0xff]
    %v325 = vld [vmem:[#allocation2 + $0x158] sm:$0xff]
    %v326 = vld [vmem:[#allocation2 + $0x1a0] sm:$0xff]
    %v327 = vld [vmem:[#allocation2 + $0x1a8] sm:$0xff]
    %v328 = vld [vmem:[#allocation2 + $0x1f0] sm:$0xff]
    %v329 = vld [vmem:[#allocation2 + $0x1f8] sm:$0xff]
    %v330 = vld [vmem:[#allocation2 + $0x240] sm:$0xff]
    %v331 = vld [vmem:[#allocation2 + $0x248] sm:$0xff]
    %v332 = vld [vmem:[#allocation2 + $0x290] sm:$0xff]
    %v333 = vld [vmem:[#allocation2 + $0x298] sm:$0xff]
    %v334 = vld [vmem:[#allocation2 + $0x2e0] sm:$0xff]
    %v335 = vld [vmem:[#allocation2 + $0x2e8] sm:$0xff]
    %v336 = vld [vmem:[#allocation2 + $0x330] sm:$0xff]
    %v337 = vld [vmem:[#allocation2 + $0x338] sm:$0xff]
    %v338 = vld [vmem:[#allocation2 + $0x380] sm:$0xff]
    %v339 = vld [vmem:[#allocation2 + $0x388] sm:$0xff]
    %v340 = vld [vmem:[#allocation2 + $0x3d0] sm:$0xff]
    %v341 = vld [vmem:[#allocation2 + $0x3d8] sm:$0xff]
    %v342 = vld [vmem:[#allocation2 + $0x420] sm:$0xff]
    %v343 = vld [vmem:[#allocation2 + $0x428] sm:$0xff]
    %v344 = vld [vmem:[#allocation2 + $0x470] sm:$0xff]
    %v345 = vld [vmem:[#allocation2 + $0x478] sm:$0xff]
    %v346 = vld [vmem:[#allocation2 + $0x4c0] sm:$0xff]
    %v347 = vld [vmem:[#allocation2 + $0x4c8] sm:$0xff]
    %v380 = vunpack.c.l.b16 %v316
    %v381 = vunpack.c.h.b16 %v316
    %v382 = vunpack.c.l.b16 %v317
    %v383 = vunpack.c.h.b16 %v317
    %v384 = vunpack.c.l.b16 %v318
    %v385 = vunpack.c.h.b16 %v318
    %v386 = vunpack.c.l.b16 %v319
    %v387 = vunpack.c.h.b16 %v319
    %v388 = vunpack.c.l.b16 %v320
    %v389 = vunpack.c.h.b16 %v320
    %v390 = vunpack.c.l.b16 %v321
    %v391 = vunpack.c.h.b16 %v321
    %v392 = vunpack.c.l.b16 %v322
    %v393 = vunpack.c.h.b16 %v322
    %v394 = vunpack.c.l.b16 %v323
    %v395 = vunpack.c.h.b16 %v323
    %v396 = vunpack.c.l.b16 %v324
    %v397 = vunpack.c.h.b16 %v324
    %v398 = vunpack.c.l.b16 %v325
    %v399 = vunpack.c.h.b16 %v325
    %v400 = vunpack.c.l.b16 %v326
    %v401 = vunpack.c.h.b16 %v326
    %v402 = vunpack.c.l.b16 %v327
    %v403 = vunpack.c.h.b16 %v327
    %v404 = vunpack.c.l.b16 %v328
    %v405 = vunpack.c.h.b16 %v328
    %v406 = vunpack.c.l.b16 %v329
    %v407 = vunpack.c.h.b16 %v329
    %v408 = vunpack.c.l.b16 %v330
    %v409 = vunpack.c.h.b16 %v330
    %v410 = vunpack.c.l.b16 %v331
    %v411 = vunpack.c.h.b16 %v331
    %v412 = vunpack.c.l.b16 %v332
    %v413 = vunpack.c.h.b16 %v332
    %v414 = vunpack.c.l.b16 %v333
    %v415 = vunpack.c.h.b16 %v333
    %v416 = vunpack.c.l.b16 %v334
    %v417 = vunpack.c.h.b16 %v334
    %v418 = vunpack.c.l.b16 %v335
    %v419 = vunpack.c.h.b16 %v335
    %v420 = vunpack.c.l.b16 %v336
    %v421 = vunpack.c.h.b16 %v336
    %v422 = vunpack.c.l.b16 %v337
    %v423 = vunpack.c.h.b16 %v337
    %v424 = vunpack.c.l.b16 %v338
    %v425 = vunpack.c.h.b16 %v338
    %v426 = vunpack.c.l.b16 %v339
    %v427 = vunpack.c.h.b16 %v339
    %v428 = vunpack.c.l.b16 %v340
    %v429 = vunpack.c.h.b16 %v340
    %v430 = vunpack.c.l.b16 %v341
    %v431 = vunpack.c.h.b16 %v341
    %v432 = vunpack.c.l.b16 %v342
    %v433 = vunpack.c.h.b16 %v342
    %v434 = vunpack.c.l.b16 %v343
    %v435 = vunpack.c.h.b16 %v343
    %v436 = vunpack.c.l.b16 %v344
    %v437 = vunpack.c.h.b16 %v344
    %v438 = vunpack.c.l.b16 %v345
    %v439 = vunpack.c.h.b16 %v345
    %v440 = vunpack.c.l.b16 %v346
    %v441 = vunpack.c.h.b16 %v346
    %v442 = vunpack.c.l.b16 %v347
    %v443 = vunpack.c.h.b16 %v347
    %v444 = vpack.c.b16 %v384, %v380
    %v445 = vpack.c.b16 %v385, %v381
    %v446 = vpack.c.b16 %v386, %v382
    %v447 = vpack.c.b16 %v387, %v383
    %v448 = vpack.c.b16 %v392, %v388
    %v449 = vpack.c.b16 %v393, %v389
    %v450 = vpack.c.b16 %v394, %v390
    %v451 = vpack.c.b16 %v395, %v391
    %v452 = vpack.c.b16 %v400, %v396
    %v453 = vpack.c.b16 %v401, %v397
    %v454 = vpack.c.b16 %v402, %v398
    %v455 = vpack.c.b16 %v403, %v399
    %v456 = vpack.c.b16 %v408, %v404
    %v457 = vpack.c.b16 %v409, %v405
    %v458 = vpack.c.b16 %v410, %v406
    %v459 = vpack.c.b16 %v411, %v407
    %v460 = vpack.c.b16 %v416, %v412
    %v461 = vpack.c.b16 %v417, %v413
    %v462 = vpack.c.b16 %v418, %v414
    %v463 = vpack.c.b16 %v419, %v415
    %v464 = vpack.c.b16 %v424, %v420
    %v465 = vpack.c.b16 %v425, %v421
    %v466 = vpack.c.b16 %v426, %v422
    %v467 = vpack.c.b16 %v427, %v423
    %v468 = vpack.c.b16 %v432, %v428
    %v469 = vpack.c.b16 %v433, %v429
    %v470 = vpack.c.b16 %v434, %v430
    %v471 = vpack.c.b16 %v435, %v431
    %v472 = vpack.c.b16 %v440, %v436
    %v473 = vpack.c.b16 %v441, %v437
    %v474 = vpack.c.b16 %v442, %v438
    %v475 = vpack.c.b16 %v443, %v439
    %508 = vmatprep.subr.bf16.mxu0 %v473
    %509 = vmatpush1.bf16.msra.mxu0 %v472
    %510 = vmatprep.subr.bf16.mxu0 %v469
    %511 = vmatpush1.bf16.msra.mxu0 %v468
    %512 = vmatprep.subr.bf16.mxu0 %v465
    %513 = vmatpush1.bf16.msra.mxu0 %v464
    %514 = vmatprep.subr.bf16.mxu0 %v461
    %515 = vmatpush1.bf16.msra.mxu0 %v460
    %516 = vmatprep.subr.bf16.mxu0 %v457
    %517 = vmatpush1.bf16.msra.mxu0 %v456
    %518 = vmatprep.subr.bf16.mxu0 %v453
    %519 = vmatpush1.bf16.msra.mxu0 %v452
    %520 = vmatprep.subr.bf16.mxu0 %v449
    %521 = vmatpush1.bf16.msra.mxu0 %v448
    %522 = vmatprep.subr.bf16.mxu0 %v445
    %523 = vmatpush1.bf16.msra.mxu0 %v444
    %524 = vmatprep.subr.bf16.mxu0 0
    %525 = vmatpush2.bf16.msra.mxu0 0
    %526 = vmatprep.subr.bf16.mxu0 0
    %527 = vmatpush2.bf16.msra.mxu0 0
    %528 = vmatprep.subr.bf16.mxu0 0
    %529 = vmatpush2.bf16.msra.mxu0 0
    %530 = vmatprep.subr.bf16.mxu0 0
    %531 = vmatpush2.bf16.msra.mxu0 0
    %532 = vmatprep.subr.bf16.mxu0 0
    %533 = vmatpush2.bf16.msra.mxu0 0
    %534 = vmatprep.subr.bf16.mxu0 0
    %535 = vmatpush2.bf16.msra.mxu0 0
    %536 = vmatprep.subr.bf16.mxu0 0
    %537 = vmatpush2.bf16.msra.mxu0 0
    %538 = vmatprep.subr.bf16.mxu0 0
    %539 = vmatpush2.bf16.msra.mxu0 0
    %540 = vmatprep.mubr.bf16.mxu0 0
    %541 = vmatmul.mubr.bf16.gmra.mxu0 %v41
    %v542 = vpop.f32.mrf.mxu0
    %v543 = vadd.f32 0.0, %v542
    %v544 = vpop.f32.mrf.mxu0
    %v545 = vadd.f32 0.0, %v544
    %v546 = vpop.f32.mrf.mxu0
    %v547 = vpop.f32.mrf.mxu0
    %548 = vdwg.mxu0
    %549 = vmatprep.subr.bf16.mxu0 %v475
    %550 = vmatpush1.bf16.msra.mxu0 %v474
    %551 = vmatprep.subr.bf16.mxu0 %v471
    %552 = vmatpush1.bf16.msra.mxu0 %v470
    %553 = vmatprep.subr.bf16.mxu0 %v467
    %554 = vmatpush1.bf16.msra.mxu0 %v466
    %555 = vmatprep.subr.bf16.mxu0 %v463
    %556 = vmatpush1.bf16.msra.mxu0 %v462
    %557 = vmatprep.subr.bf16.mxu0 %v459
    %558 = vmatpush1.bf16.msra.mxu0 %v458
    %559 = vmatprep.subr.bf16.mxu0 %v455
    %560 = vmatpush1.bf16.msra.mxu0 %v454
    %561 = vmatprep.subr.bf16.mxu0 %v451
    %562 = vmatpush1.bf16.msra.mxu0 %v450
    %563 = vmatprep.subr.bf16.mxu0 %v447
    %564 = vmatpush1.bf16.msra.mxu0 %v446
    %565 = vmatprep.subr.bf16.mxu0 0
    %566 = vmatpush2.bf16.msra.mxu0 0
    %567 = vmatprep.subr.bf16.mxu0 0
    %568 = vmatpush2.bf16.msra.mxu0 0
    %569 = vmatprep.subr.bf16.mxu0 0
    %570 = vmatpush2.bf16.msra.mxu0 0
    %571 = vmatprep.subr.bf16.mxu0 0
    %572 = vmatpush2.bf16.msra.mxu0 0
    %573 = vmatprep.subr.bf16.mxu0 0
    %574 = vmatpush2.bf16.msra.mxu0 0
    %575 = vmatprep.subr.bf16.mxu0 0
    %576 = vmatpush2.bf16.msra.mxu0 0
    %577 = vmatprep.subr.bf16.mxu0 0
    %578 = vmatpush2.bf16.msra.mxu0 0
    %579 = vmatprep.subr.bf16.mxu0 0
    %580 = vmatpush2.bf16.msra.mxu0 0
    %581 = vmatprep.mubr.bf16.mxu0 0
    %582 = vmatmul.mubr.bf16.gmra.mxu0 %v41
    %v583 = vpop.f32.mrf.mxu0
    %v584 = vadd.f32 0.0, %v583
    %v585 = vpop.f32.mrf.mxu0
    %v586 = vadd.f32 0.0, %v585
    %v587 = vpop.f32.mrf.mxu0
    %v588 = vpop.f32.mrf.mxu0
    %589 = vdwg.mxu0
    %v590 = vmax.f32 %v269, %v543
    %v591 = vmax.f32 %v271, %v545
    %v592 = vmax.f32 %v310, %v584
    %v593 = vmax.f32 %v312, %v586
    %v594 = vld [vmem:[#allocation2 + $0x20] sm:$0xff]
    %v595 = vld [vmem:[#allocation2 + $0x28] sm:$0xff]
    %v596 = vld [vmem:[#allocation2 + $0x70] sm:$0xff]
    %v597 = vld [vmem:[#allocation2 + $0x78] sm:$0xff]
    %v598 = vld [vmem:[#allocation2 + $0xc0] sm:$0xff]
    %v599 = vld [vmem:[#allocation2 + $0xc8] sm:$0xff]
    %v600 = vld [vmem:[#allocation2 + $0x110] sm:$0xff]
    %v601 = vld [vmem:[#allocation2 + $0x118] sm:$0xff]
    %v602 = vld [vmem:[#allocation2 + $0x160] sm:$0xff]
    %v603 = vld [vmem:[#allocation2 + $0x168] sm:$0xff]
    %v604 = vld [vmem:[#allocation2 + $0x1b0] sm:$0xff]
    %v605 = vld [vmem:[#allocation2 + $0x1b8] sm:$0xff]
    %v606 = vld [vmem:[#allocation2 + $0x200] sm:$0xff]
    %v607 = vld [vmem:[#allocation2 + $0x208] sm:$0xff]
    %v608 = vld [vmem:[#allocation2 + $0x250] sm:$0xff]
    %v609 = vld [vmem:[#allocation2 + $0x258] sm:$0xff]
    %v610 = vld [vmem:[#allocation2 + $0x2a0] sm:$0xff]
    %v611 = vld [vmem:[#allocation2 + $0x2a8] sm:$0xff]
    %v612 = vld [vmem:[#allocation2 + $0x2f0] sm:$0xff]
    %v613 = vld [vmem:[#allocation2 + $0x2f8] sm:$0xff]
    %v614 = vld [vmem:[#allocation2 + $0x340] sm:$0xff]
    %v615 = vld [vmem:[#allocation2 + $0x348] sm:$0xff]
    %v616 = vld [vmem:[#allocation2 + $0x390] sm:$0xff]
    %v617 = vld [vmem:[#allocation2 + $0x398] sm:$0xff]
    %v618 = vld [vmem:[#allocation2 + $0x3e0] sm:$0xff]
    %v619 = vld [vmem:[#allocation2 + $0x3e8] sm:$0xff]
    %v620 = vld [vmem:[#allocation2 + $0x430] sm:$0xff]
    %v621 = vld [vmem:[#allocation2 + $0x438] sm:$0xff]
    %v622 = vld [vmem:[#allocation2 + $0x480] sm:$0xff]
    %v623 = vld [vmem:[#allocation2 + $0x488] sm:$0xff]
    %v624 = vld [vmem:[#allocation2 + $0x4d0] sm:$0xff]
    %v625 = vld [vmem:[#allocation2 + $0x4d8] sm:$0xff]
    %v658 = vunpack.c.l.b16 %v594
    %v659 = vunpack.c.h.b16 %v594
    %v660 = vunpack.c.l.b16 %v595
    %v661 = vunpack.c.h.b16 %v595
    %v662 = vunpack.c.l.b16 %v596
    %v663 = vunpack.c.h.b16 %v596
    %v664 = vunpack.c.l.b16 %v597
    %v665 = vunpack.c.h.b16 %v597
    %v666 = vunpack.c.l.b16 %v598
    %v667 = vunpack.c.h.b16 %v598
    %v668 = vunpack.c.l.b16 %v599
    %v669 = vunpack.c.h.b16 %v599
    %v670 = vunpack.c.l.b16 %v600
    %v671 = vunpack.c.h.b16 %v600
    %v672 = vunpack.c.l.b16 %v601
    %v673 = vunpack.c.h.b16 %v601
    %v674 = vunpack.c.l.b16 %v602
    %v675 = vunpack.c.h.b16 %v602
    %v676 = vunpack.c.l.b16 %v603
    %v677 = vunpack.c.h.b16 %v603
    %v678 = vunpack.c.l.b16 %v604
    %v679 = vunpack.c.h.b16 %v604
    %v680 = vunpack.c.l.b16 %v605
    %v681 = vunpack.c.h.b16 %v605
    %v682 = vunpack.c.l.b16 %v606
    %v683 = vunpack.c.h.b16 %v606
    %v684 = vunpack.c.l.b16 %v607
    %v685 = vunpack.c.h.b16 %v607
    %v686 = vunpack.c.l.b16 %v608
    %v687 = vunpack.c.h.b16 %v608
    %v688 = vunpack.c.l.b16 %v609
    %v689 = vunpack.c.h.b16 %v609
    %v690 = vunpack.c.l.b16 %v610
    %v691 = vunpack.c.h.b16 %v610
    %v692 = vunpack.c.l.b16 %v611
    %v693 = vunpack.c.h.b16 %v611
    %v694 = vunpack.c.l.b16 %v612
    %v695 = vunpack.c.h.b16 %v612
    %v696 = vunpack.c.l.b16 %v613
    %v697 = vunpack.c.h.b16 %v613
    %v698 = vunpack.c.l.b16 %v614
    %v699 = vunpack.c.h.b16 %v614
    %v700 = vunpack.c.l.b16 %v615
    %v701 = vunpack.c.h.b16 %v615
    %v702 = vunpack.c.l.b16 %v616
    %v703 = vunpack.c.h.b16 %v616
    %v704 = vunpack.c.l.b16 %v617
    %v705 = vunpack.c.h.b16 %v617
    %v706 = vunpack.c.l.b16 %v618
    %v707 = vunpack.c.h.b16 %v618
    %v708 = vunpack.c.l.b16 %v619
    %v709 = vunpack.c.h.b16 %v619
    %v710 = vunpack.c.l.b16 %v620
    %v711 = vunpack.c.h.b16 %v620
    %v712 = vunpack.c.l.b16 %v621
    %v713 = vunpack.c.h.b16 %v621
    %v714 = vunpack.c.l.b16 %v622
    %v715 = vunpack.c.h.b16 %v622
    %v716 = vunpack.c.l.b16 %v623
    %v717 = vunpack.c.h.b16 %v623
    %v718 = vunpack.c.l.b16 %v624
    %v719 = vunpack.c.h.b16 %v624
    %v720 = vunpack.c.l.b16 %v625
    %v721 = vunpack.c.h.b16 %v625
    %v722 = vpack.c.b16 %v662, %v658
    %v723 = vpack.c.b16 %v663, %v659
    %v724 = vpack.c.b16 %v664, %v660
    %v725 = vpack.c.b16 %v665, %v661
    %v726 = vpack.c.b16 %v670, %v666
    %v727 = vpack.c.b16 %v671, %v667
    %v728 = vpack.c.b16 %v672, %v668
    %v729 = vpack.c.b16 %v673, %v669
    %v730 = vpack.c.b16 %v678, %v674
    %v731 = vpack.c.b16 %v679, %v675
    %v732 = vpack.c.b16 %v680, %v676
    %v733 = vpack.c.b16 %v681, %v677
    %v734 = vpack.c.b16 %v686, %v682
    %v735 = vpack.c.b16 %v687, %v683
    %v736 = vpack.c.b16 %v688, %v684
    %v737 = vpack.c.b16 %v689, %v685
    %v738 = vpack.c.b16 %v694, %v690
    %v739 = vpack.c.b16 %v695, %v691
    %v740 = vpack.c.b16 %v696, %v692
    %v741 = vpack.c.b16 %v697, %v693
    %v742 = vpack.c.b16 %v702, %v698
    %v743 = vpack.c.b16 %v703, %v699
    %v744 = vpack.c.b16 %v704, %v700
    %v745 = vpack.c.b16 %v705, %v701
    %v746 = vpack.c.b16 %v710, %v706
    %v747 = vpack.c.b16 %v711, %v707
    %v748 = vpack.c.b16 %v712, %v708
    %v749 = vpack.c.b16 %v713, %v709
    %v750 = vpack.c.b16 %v718, %v714
    %v751 = vpack.c.b16 %v719, %v715
    %v752 = vpack.c.b16 %v720, %v716
    %v753 = vpack.c.b16 %v721, %v717
    %786 = vmatprep.subr.bf16.mxu0 %v751
    %787 = vmatpush1.bf16.msra.mxu0 %v750
    %788 = vmatprep.subr.bf16.mxu0 %v747
    %789 = vmatpush1.bf16.msra.mxu0 %v746
    %790 = vmatprep.subr.bf16.mxu0 %v743
    %791 = vmatpush1.bf16.msra.mxu0 %v742
    %792 = vmatprep.subr.bf16.mxu0 %v739
    %793 = vmatpush1.bf16.msra.mxu0 %v738
    %794 = vmatprep.subr.bf16.mxu0 %v735
    %795 = vmatpush1.bf16.msra.mxu0 %v734
    %796 = vmatprep.subr.bf16.mxu0 %v731
    %797 = vmatpush1.bf16.msra.mxu0 %v730
    %798 = vmatprep.subr.bf16.mxu0 %v727
    %799 = vmatpush1.bf16.msra.mxu0 %v726
    %800 = vmatprep.subr.bf16.mxu0 %v723
    %801 = vmatpush1.bf16.msra.mxu0 %v722
    %802 = vmatprep.subr.bf16.mxu0 0
    %803 = vmatpush2.bf16.msra.mxu0 0
    %804 = vmatprep.subr.bf16.mxu0 0
    %805 = vmatpush2.bf16.msra.mxu0 0
    %806 = vmatprep.subr.bf16.mxu0 0
    %807 = vmatpush2.bf16.msra.mxu0 0
    %808 = vmatprep.subr.bf16.mxu0 0
    %809 = vmatpush2.bf16.msra.mxu0 0
    %810 = vmatprep.subr.bf16.mxu0 0
    %811 = vmatpush2.bf16.msra.mxu0 0
    %812 = vmatprep.subr.bf16.mxu0 0
    %813 = vmatpush2.bf16.msra.mxu0 0
    %814 = vmatprep.subr.bf16.mxu0 0
    %815 = vmatpush2.bf16.msra.mxu0 0
    %816 = vmatprep.subr.bf16.mxu0 0
    %817 = vmatpush2.bf16.msra.mxu0 0
    %818 = vmatprep.mubr.bf16.mxu0 0
    %819 = vmatmul.mubr.bf16.gmra.mxu0 %v41
    %v820 = vpop.f32.mrf.mxu0
    %v821 = vadd.f32 0.0, %v820
    %v822 = vpop.f32.mrf.mxu0
    %v823 = vadd.f32 0.0, %v822
    %v824 = vpop.f32.mrf.mxu0
    %v825 = vpop.f32.mrf.mxu0
    %826 = vdwg.mxu0
    %827 = vmatprep.subr.bf16.mxu0 %v753
    %828 = vmatpush1.bf16.msra.mxu0 %v752
    %829 = vmatprep.subr.bf16.mxu0 %v749
    %830 = vmatpush1.bf16.msra.mxu0 %v748
    %831 = vmatprep.subr.bf16.mxu0 %v745
    %832 = vmatpush1.bf16.msra.mxu0 %v744
    %833 = vmatprep.subr.bf16.mxu0 %v741
    %834 = vmatpush1.bf16.msra.mxu0 %v740
    %835 = vmatprep.subr.bf16.mxu0 %v737
    %836 = vmatpush1.bf16.msra.mxu0 %v736
    %837 = vmatprep.subr.bf16.mxu0 %v733
    %838 = vmatpush1.bf16.msra.mxu0 %v732
    %839 = vmatprep.subr.bf16.mxu0 %v729
    %840 = vmatpush1.bf16.msra.mxu0 %v728
    %841 = vmatprep.subr.bf16.mxu0 %v725
    %842 = vmatpush1.bf16.msra.mxu0 %v724
    %843 = vmatprep.subr.bf16.mxu0 0
    %844 = vmatpush2.bf16.msra.mxu0 0
    %845 = vmatprep.subr.bf16.mxu0 0
    %846 = vmatpush2.bf16.msra.mxu0 0
    %847 = vmatprep.subr.bf16.mxu0 0
    %848 = vmatpush2.bf16.msra.mxu0 0
    %849 = vmatprep.subr.bf16.mxu0 0
    %850 = vmatpush2.bf16.msra.mxu0 0
    %851 = vmatprep.subr.bf16.mxu0 0
    %852 = vmatpush2.bf16.msra.mxu0 0
    %853 = vmatprep.subr.bf16.mxu0 0
    %854 = vmatpush2.bf16.msra.mxu0 0
    %855 = vmatprep.subr.bf16.mxu0 0
    %856 = vmatpush2.bf16.msra.mxu0 0
    %857 = vmatprep.subr.bf16.mxu0 0
    %858 = vmatpush2.bf16.msra.mxu0 0
    %859 = vmatprep.mubr.bf16.mxu0 0
    %860 = vmatmul.mubr.bf16.gmra.mxu0 %v41
    %v861 = vpop.f32.mrf.mxu0
    %v862 = vadd.f32 0.0, %v861
    %v863 = vpop.f32.mrf.mxu0
    %v864 = vadd.f32 0.0, %v863
    %v865 = vpop.f32.mrf.mxu0
    %v866 = vpop.f32.mrf.mxu0
    %867 = vdwg.mxu0
    %v868 = vmax.f32 %v590, %v821
    %v869 = vmax.f32 %v591, %v823
    %v870 = vmax.f32 %v592, %v862
    %v871 = vmax.f32 %v593, %v864
    %v872 = vld [vmem:[#allocation2 + $0x30] sm:$0xff]
    %v873 = vld [vmem:[#allocation2 + $0x38] sm:$0xff]
    %v874 = vld [vmem:[#allocation2 + $0x80] sm:$0xff]
    %v875 = vld [vmem:[#allocation2 + $0x88] sm:$0xff]
    %v876 = vld [vmem:[#allocation2 + $0xd0] sm:$0xff]
    %v877 = vld [vmem:[#allocation2 + $0xd8] sm:$0xff]
    %v878 = vld [vmem:[#allocation2 + $0x120] sm:$0xff]
    %v879 = vld [vmem:[#allocation2 + $0x128] sm:$0xff]
    %v880 = vld [vmem:[#allocation2 + $0x170] sm:$0xff]
    %v881 = vld [vmem:[#allocation2 + $0x178] sm:$0xff]
    %v882 = vld [vmem:[#allocation2 + $0x1c0] sm:$0xff]
    %v883 = vld [vmem:[#allocation2 + $0x1c8] sm:$0xff]
    %v884 = vld [vmem:[#allocation2 + $0x210] sm:$0xff]
    %v885 = vld [vmem:[#allocation2 + $0x218] sm:$0xff]
    %v886 = vld [vmem:[#allocation2 + $0x260] sm:$0xff]
    %v887 = vld [vmem:[#allocation2 + $0x268] sm:$0xff]
    %v888 = vld [vmem:[#allocation2 + $0x2b0] sm:$0xff]
    %v889 = vld [vmem:[#allocation2 + $0x2b8] sm:$0xff]
    %v890 = vld [vmem:[#allocation2 + $0x300] sm:$0xff]
    %v891 = vld [vmem:[#allocation2 + $0x308] sm:$0xff]
    %v892 = vld [vmem:[#allocation2 + $0x350] sm:$0xff]
    %v893 = vld [vmem:[#allocation2 + $0x358] sm:$0xff]
    %v894 = vld [vmem:[#allocation2 + $0x3a0] sm:$0xff]
    %v895 = vld [vmem:[#allocation2 + $0x3a8] sm:$0xff]
    %v896 = vld [vmem:[#allocation2 + $0x3f0] sm:$0xff]
    %v897 = vld [vmem:[#allocation2 + $0x3f8] sm:$0xff]
    %v898 = vld [vmem:[#allocation2 + $0x440] sm:$0xff]
    %v899 = vld [vmem:[#allocation2 + $0x448] sm:$0xff]
    %v900 = vld [vmem:[#allocation2 + $0x490] sm:$0xff]
    %v901 = vld [vmem:[#allocation2 + $0x498] sm:$0xff]
    %v902 = vld [vmem:[#allocation2 + $0x4e0] sm:$0xff]
    %v903 = vld [vmem:[#allocation2 + $0x4e8] sm:$0xff]
    %v936 = vunpack.c.l.b16 %v872
    %v937 = vunpack.c.h.b16 %v872
    %v938 = vunpack.c.l.b16 %v873
    %v939 = vunpack.c.h.b16 %v873
    %v940 = vunpack.c.l.b16 %v874
    %v941 = vunpack.c.h.b16 %v874
    %v942 = vunpack.c.l.b16 %v875
    %v943 = vunpack.c.h.b16 %v875
    %v944 = vunpack.c.l.b16 %v876
    %v945 = vunpack.c.h.b16 %v876
    %v946 = vunpack.c.l.b16 %v877
    %v947 = vunpack.c.h.b16 %v877
    %v948 = vunpack.c.l.b16 %v878
    %v949 = vunpack.c.h.b16 %v878
    %v950 = vunpack.c.l.b16 %v879
    %v951 = vunpack.c.h.b16 %v879
    %v952 = vunpack.c.l.b16 %v880
    %v953 = vunpack.c.h.b16 %v880
    %v954 = vunpack.c.l.b16 %v881
    %v955 = vunpack.c.h.b16 %v881
    %v956 = vunpack.c.l.b16 %v882
    %v957 = vunpack.c.h.b16 %v882
    %v958 = vunpack.c.l.b16 %v883
    %v959 = vunpack.c.h.b16 %v883
    %v960 = vunpack.c.l.b16 %v884
    %v961 = vunpack.c.h.b16 %v884
    %v962 = vunpack.c.l.b16 %v885
    %v963 = vunpack.c.h.b16 %v885
    %v964 = vunpack.c.l.b16 %v886
    %v965 = vunpack.c.h.b16 %v886
    %v966 = vunpack.c.l.b16 %v887
    %v967 = vunpack.c.h.b16 %v887
    %v968 = vunpack.c.l.b16 %v888
    %v969 = vunpack.c.h.b16 %v888
    %v970 = vunpack.c.l.b16 %v889
    %v971 = vunpack.c.h.b16 %v889
    %v972 = vunpack.c.l.b16 %v890
    %v973 = vunpack.c.h.b16 %v890
    %v974 = vunpack.c.l.b16 %v891
    %v975 = vunpack.c.h.b16 %v891
    %v976 = vunpack.c.l.b16 %v892
    %v977 = vunpack.c.h.b16 %v892
    %v978 = vunpack.c.l.b16 %v893
    %v979 = vunpack.c.h.b16 %v893
    %v980 = vunpack.c.l.b16 %v894
    %v981 = vunpack.c.h.b16 %v894
    %v982 = vunpack.c.l.b16 %v895
    %v983 = vunpack.c.h.b16 %v895
    %v984 = vunpack.c.l.b16 %v896
    %v985 = vunpack.c.h.b16 %v896
    %v986 = vunpack.c.l.b16 %v897
    %v987 = vunpack.c.h.b16 %v897
    %v988 = vunpack.c.l.b16 %v898
    %v989 = vunpack.c.h.b16 %v898
    %v990 = vunpack.c.l.b16 %v899
    %v991 = vunpack.c.h.b16 %v899
    %v992 = vunpack.c.l.b16 %v900
    %v993 = vunpack.c.h.b16 %v900
    %v994 = vunpack.c.l.b16 %v901
    %v995 = vunpack.c.h.b16 %v901
    %v996 = vunpack.c.l.b16 %v902
    %v997 = vunpack.c.h.b16 %v902
    %v998 = vunpack.c.l.b16 %v903
    %v999 = vunpack.c.h.b16 %v903
    %v1000 = vpack.c.b16 %v940, %v936
    %v1001 = vpack.c.b16 %v941, %v937
    %v1002 = vpack.c.b16 %v942, %v938
    %v1003 = vpack.c.b16 %v943, %v939
    %v1004 = vpack.c.b16 %v948, %v944
    %v1005 = vpack.c.b16 %v949, %v945
    %v1006 = vpack.c.b16 %v950, %v946
    %v1007 = vpack.c.b16 %v951, %v947
    %v1008 = vpack.c.b16 %v956, %v952
    %v1009 = vpack.c.b16 %v957, %v953
    %v1010 = vpack.c.b16 %v958, %v954
    %v1011 = vpack.c.b16 %v959, %v955
    %v1012 = vpack.c.b16 %v964, %v960
    %v1013 = vpack.c.b16 %v965, %v961
    %v1014 = vpack.c.b16 %v966, %v962
    %v1015 = vpack.c.b16 %v967, %v963
    %v1016 = vpack.c.b16 %v972, %v968
    %v1017 = vpack.c.b16 %v973, %v969
    %v1018 = vpack.c.b16 %v974, %v970
    %v1019 = vpack.c.b16 %v975, %v971
    %v1020 = vpack.c.b16 %v980, %v976
    %v1021 = vpack.c.b16 %v981, %v977
    %v1022 = vpack.c.b16 %v982, %v978
    %v1023 = vpack.c.b16 %v983, %v979
    %v1024 = vpack.c.b16 %v988, %v984
    %v1025 = vpack.c.b16 %v989, %v985
    %v1026 = vpack.c.b16 %v990, %v986
    %v1027 = vpack.c.b16 %v991, %v987
    %v1028 = vpack.c.b16 %v996, %v992
    %v1029 = vpack.c.b16 %v997, %v993
    %v1030 = vpack.c.b16 %v998, %v994
    %v1031 = vpack.c.b16 %v999, %v995
    %1064 = vmatprep.subr.bf16.mxu0 %v1029
    %1065 = vmatpush1.bf16.msra.mxu0 %v1028
    %1066 = vmatprep.subr.bf16.mxu0 %v1025
    %1067 = vmatpush1.bf16.msra.mxu0 %v1024
    %1068 = vmatprep.subr.bf16.mxu0 %v1021
    %1069 = vmatpush1.bf16.msra.mxu0 %v1020
    %1070 = vmatprep.subr.bf16.mxu0 %v1017
    %1071 = vmatpush1.bf16.msra.mxu0 %v1016
    %1072 = vmatprep.subr.bf16.mxu0 %v1013
    %1073 = vmatpush1.bf16.msra.mxu0 %v1012
    %1074 = vmatprep.subr.bf16.mxu0 %v1009
    %1075 = vmatpush1.bf16.msra.mxu0 %v1008
    %1076 = vmatprep.subr.bf16.mxu0 %v1005
    %1077 = vmatpush1.bf16.msra.mxu0 %v1004
    %1078 = vmatprep.subr.bf16.mxu0 %v1001
    %1079 = vmatpush1.bf16.msra.mxu0 %v1000
    %1080 = vmatprep.subr.bf16.mxu0 0
    %1081 = vmatpush2.bf16.msra.mxu0 0
    %1082 = vmatprep.subr.bf16.mxu0 0
    %1083 = vmatpush2.bf16.msra.mxu0 0
    %1084 = vmatprep.subr.bf16.mxu0 0
    %1085 = vmatpush2.bf16.msra.mxu0 0
    %1086 = vmatprep.subr.bf16.mxu0 0
    %1087 = vmatpush2.bf16.msra.mxu0 0
    %1088 = vmatprep.subr.bf16.mxu0 0
    %1089 = vmatpush2.bf16.msra.mxu0 0
    %1090 = vmatprep.subr.bf16.mxu0 0
    %1091 = vmatpush2.bf16.msra.mxu0 0
    %1092 = vmatprep.subr.bf16.mxu0 0
    %1093 = vmatpush2.bf16.msra.mxu0 0
    %1094 = vmatprep.subr.bf16.mxu0 0
    %1095 = vmatpush2.bf16.msra.mxu0 0
    %1096 = vmatprep.mubr.bf16.mxu0 0
    %1097 = vmatmul.mubr.bf16.gmra.mxu0 %v41
    %v1098 = vpop.f32.mrf.mxu0
    %v1099 = vadd.f32 0.0, %v1098
    %v1100 = vpop.f32.mrf.mxu0
    %v1101 = vadd.f32 0.0, %v1100
    %v1102 = vpop.f32.mrf.mxu0
    %v1103 = vpop.f32.mrf.mxu0
    %1104 = vdwg.mxu0
    %1105 = vmatprep.subr.bf16.mxu0 %v1031
    %1106 = vmatpush1.bf16.msra.mxu0 %v1030
    %1107 = vmatprep.subr.bf16.mxu0 %v1027
    %1108 = vmatpush1.bf16.msra.mxu0 %v1026
    %1109 = vmatprep.subr.bf16.mxu0 %v1023
    %1110 = vmatpush1.bf16.msra.mxu0 %v1022
    %1111 = vmatprep.subr.bf16.mxu0 %v1019
    %1112 = vmatpush1.bf16.msra.mxu0 %v1018
    %1113 = vmatprep.subr.bf16.mxu0 %v1015
    %1114 = vmatpush1.bf16.msra.mxu0 %v1014
    %1115 = vmatprep.subr.bf16.mxu0 %v1011
    %1116 = vmatpush1.bf16.msra.mxu0 %v1010
    %1117 = vmatprep.subr.bf16.mxu0 %v1007
    %1118 = vmatpush1.bf16.msra.mxu0 %v1006
    %1119 = vmatprep.subr.bf16.mxu0 %v1003
    %1120 = vmatpush1.bf16.msra.mxu0 %v1002
    %1121 = vmatprep.subr.bf16.mxu0 0
    %1122 = vmatpush2.bf16.msra.mxu0 0
    %1123 = vmatprep.subr.bf16.mxu0 0
    %1124 = vmatpush2.bf16.msra.mxu0 0
    %1125 = vmatprep.subr.bf16.mxu0 0
    %1126 = vmatpush2.bf16.msra.mxu0 0
    %1127 = vmatprep.subr.bf16.mxu0 0
    %1128 = vmatpush2.bf16.msra.mxu0 0
    %1129 = vmatprep.subr.bf16.mxu0 0
    %1130 = vmatpush2.bf16.msra.mxu0 0
    %1131 = vmatprep.subr.bf16.mxu0 0
    %1132 = vmatpush2.bf16.msra.mxu0 0
    %1133 = vmatprep.subr.bf16.mxu0 0
    %1134 = vmatpush2.bf16.msra.mxu0 0
    %1135 = vmatprep.subr.bf16.mxu0 0
    %1136 = vmatpush2.bf16.msra.mxu0 0
    %1137 = vmatprep.mubr.bf16.mxu0 0
    %1138 = vmatmul.mubr.bf16.gmra.mxu0 %v41
    %v1139 = vpop.f32.mrf.mxu0
    %v1140 = vadd.f32 0.0, %v1139
    %v1141 = vpop.f32.mrf.mxu0
    %v1142 = vadd.f32 0.0, %v1141
    %v1143 = vpop.f32.mrf.mxu0
    %v1144 = vpop.f32.mrf.mxu0
    %1145 = vdwg.mxu0
    %v1146 = vmax.f32 %v868, %v1099
    %v1147 = vmax.f32 %v869, %v1101
    %v1148 = vmax.f32 %v870, %v1140
    %v1149 = vmax.f32 %v871, %v1142
    %v1150 = vld [vmem:[#allocation2 + $0x40] sm:$0xff]
    %v1151 = vld [vmem:[#allocation2 + $0x48] sm:$0xff]
    %v1152 = vld [vmem:[#allocation2 + $0x90] sm:$0xff]
    %v1153 = vld [vmem:[#allocation2 + $0x98] sm:$0xff]
    %v1154 = vld [vmem:[#allocation2 + $0xe0] sm:$0xff]
    %v1155 = vld [vmem:[#allocation2 + $0xe8] sm:$0xff]
    %v1156 = vld [vmem:[#allocation2 + $0x130] sm:$0xff]
    %v1157 = vld [vmem:[#allocation2 + $0x138] sm:$0xff]
    %v1158 = vld [vmem:[#allocation2 + $0x180] sm:$0xff]
    %v1159 = vld [vmem:[#allocation2 + $0x188] sm:$0xff]
    %v1160 = vld [vmem:[#allocation2 + $0x1d0] sm:$0xff]
    %v1161 = vld [vmem:[#allocation2 + $0x1d8] sm:$0xff]
    %v1162 = vld [vmem:[#allocation2 + $0x220] sm:$0xff]
    %v1163 = vld [vmem:[#allocation2 + $0x228] sm:$0xff]
    %v1164 = vld [vmem:[#allocation2 + $0x270] sm:$0xff]
    %v1165 = vld [vmem:[#allocation2 + $0x278] sm:$0xff]
    %v1166 = vld [vmem:[#allocation2 + $0x2c0] sm:$0xff]
    %v1167 = vld [vmem:[#allocation2 + $0x2c8] sm:$0xff]
    %v1168 = vld [vmem:[#allocation2 + $0x310] sm:$0xff]
    %v1169 = vld [vmem:[#allocation2 + $0x318] sm:$0xff]
    %v1170 = vld [vmem:[#allocation2 + $0x360] sm:$0xff]
    %v1171 = vld [vmem:[#allocation2 + $0x368] sm:$0xff]
    %v1172 = vld [vmem:[#allocation2 + $0x3b0] sm:$0xff]
    %v1173 = vld [vmem:[#allocation2 + $0x3b8] sm:$0xff]
    %v1174 = vld [vmem:[#allocation2 + $0x400] sm:$0xff]
    %v1175 = vld [vmem:[#allocation2 + $0x408] sm:$0xff]
    %v1176 = vld [vmem:[#allocation2 + $0x450] sm:$0xff]
    %v1177 = vld [vmem:[#allocation2 + $0x458] sm:$0xff]
    %v1178 = vld [vmem:[#allocation2 + $0x4a0] sm:$0xff]
    %v1179 = vld [vmem:[#allocation2 + $0x4a8] sm:$0xff]
    %v1180 = vld [vmem:[#allocation2 + $0x4f0] sm:$0xff]
    %v1181 = vld [vmem:[#allocation2 + $0x4f8] sm:$0xff]
    %v1214 = vunpack.c.l.b16 %v1150
    %v1215 = vunpack.c.h.b16 %v1150
    %v1216 = vunpack.c.l.b16 %v1151
    %v1217 = vunpack.c.h.b16 %v1151
    %v1218 = vunpack.c.l.b16 %v1152
    %v1219 = vunpack.c.h.b16 %v1152
    %v1220 = vunpack.c.l.b16 %v1153
    %v1221 = vunpack.c.h.b16 %v1153
    %v1222 = vunpack.c.l.b16 %v1154
    %v1223 = vunpack.c.h.b16 %v1154
    %v1224 = vunpack.c.l.b16 %v1155
    %v1225 = vunpack.c.h.b16 %v1155
    %v1226 = vunpack.c.l.b16 %v1156
    %v1227 = vunpack.c.h.b16 %v1156
    %v1228 = vunpack.c.l.b16 %v1157
    %v1229 = vunpack.c.h.b16 %v1157
    %v1230 = vunpack.c.l.b16 %v1158
    %v1231 = vunpack.c.h.b16 %v1158
    %v1232 = vunpack.c.l.b16 %v1159
    %v1233 = vunpack.c.h.b16 %v1159
    %v1234 = vunpack.c.l.b16 %v1160
    %v1235 = vunpack.c.h.b16 %v1160
    %v1236 = vunpack.c.l.b16 %v1161
    %v1237 = vunpack.c.h.b16 %v1161
    %v1238 = vunpack.c.l.b16 %v1162
    %v1239 = vunpack.c.h.b16 %v1162
    %v1240 = vunpack.c.l.b16 %v1163
    %v1241 = vunpack.c.h.b16 %v1163
    %v1242 = vunpack.c.l.b16 %v1164
    %v1243 = vunpack.c.h.b16 %v1164
    %v1244 = vunpack.c.l.b16 %v1165
    %v1245 = vunpack.c.h.b16 %v1165
    %v1246 = vunpack.c.l.b16 %v1166
    %v1247 = vunpack.c.h.b16 %v1166
    %v1248 = vunpack.c.l.b16 %v1167
    %v1249 = vunpack.c.h.b16 %v1167
    %v1250 = vunpack.c.l.b16 %v1168
    %v1251 = vunpack.c.h.b16 %v1168
    %v1252 = vunpack.c.l.b16 %v1169
    %v1253 = vunpack.c.h.b16 %v1169
    %v1254 = vunpack.c.l.b16 %v1170
    %v1255 = vunpack.c.h.b16 %v1170
    %v1256 = vunpack.c.l.b16 %v1171
    %v1257 = vunpack.c.h.b16 %v1171
    %v1258 = vunpack.c.l.b16 %v1172
    %v1259 = vunpack.c.h.b16 %v1172
    %v1260 = vunpack.c.l.b16 %v1173
    %v1261 = vunpack.c.h.b16 %v1173
    %v1262 = vunpack.c.l.b16 %v1174
    %v1263 = vunpack.c.h.b16 %v1174
    %v1264 = vunpack.c.l.b16 %v1175
    %v1265 = vunpack.c.h.b16 %v1175
    %v1266 = vunpack.c.l.b16 %v1176
    %v1267 = vunpack.c.h.b16 %v1176
    %v1268 = vunpack.c.l.b16 %v1177
    %v1269 = vunpack.c.h.b16 %v1177
    %v1270 = vunpack.c.l.b16 %v1178
    %v1271 = vunpack.c.h.b16 %v1178
    %v1272 = vunpack.c.l.b16 %v1179
    %v1273 = vunpack.c.h.b16 %v1179
    %v1274 = vunpack.c.l.b16 %v1180
    %v1275 = vunpack.c.h.b16 %v1180
    %v1276 = vunpack.c.l.b16 %v1181
    %v1277 = vunpack.c.h.b16 %v1181
    %v1278 = vpack.c.b16 %v1218, %v1214
    %v1279 = vpack.c.b16 %v1219, %v1215
    %v1280 = vpack.c.b16 %v1220, %v1216
    %v1281 = vpack.c.b16 %v1221, %v1217
    %v1282 = vpack.c.b16 %v1226, %v1222
    %v1283 = vpack.c.b16 %v1227, %v1223
    %v1284 = vpack.c.b16 %v1228, %v1224
    %v1285 = vpack.c.b16 %v1229, %v1225
    %v1286 = vpack.c.b16 %v1234, %v1230
    %v1287 = vpack.c.b16 %v1235, %v1231
    %v1288 = vpack.c.b16 %v1236, %v1232
    %v1289 = vpack.c.b16 %v1237, %v1233
    %v1290 = vpack.c.b16 %v1242, %v1238
    %v1291 = vpack.c.b16 %v1243, %v1239
    %v1292 = vpack.c.b16 %v1244, %v1240
    %v1293 = vpack.c.b16 %v1245, %v1241
    %v1294 = vpack.c.b16 %v1250, %v1246
    %v1295 = vpack.c.b16 %v1251, %v1247
    %v1296 = vpack.c.b16 %v1252, %v1248
    %v1297 = vpack.c.b16 %v1253, %v1249
    %v1298 = vpack.c.b16 %v1258, %v1254
    %v1299 = vpack.c.b16 %v1259, %v1255
    %v1300 = vpack.c.b16 %v1260, %v1256
    %v1301 = vpack.c.b16 %v1261, %v1257
    %v1302 = vpack.c.b16 %v1266, %v1262
    %v1303 = vpack.c.b16 %v1267, %v1263
    %v1304 = vpack.c.b16 %v1268, %v1264
    %v1305 = vpack.c.b16 %v1269, %v1265
    %v1306 = vpack.c.b16 %v1274, %v1270
    %v1307 = vpack.c.b16 %v1275, %v1271
    %v1308 = vpack.c.b16 %v1276, %v1272
    %v1309 = vpack.c.b16 %v1277, %v1273
    %1342 = vmatprep.subr.bf16.mxu0 %v1307
    %1343 = vmatpush1.bf16.msra.mxu0 %v1306
    %1344 = vmatprep.subr.bf16.mxu0 %v1303
    %1345 = vmatpush1.bf16.msra.mxu0 %v1302
    %1346 = vmatprep.subr.bf16.mxu0 %v1299
    %1347 = vmatpush1.bf16.msra.mxu0 %v1298
    %1348 = vmatprep.subr.bf16.mxu0 %v1295
    %1349 = vmatpush1.bf16.msra.mxu0 %v1294
    %1350 = vmatprep.subr.bf16.mxu0 %v1291
    %1351 = vmatpush1.bf16.msra.mxu0 %v1290
    %1352 = vmatprep.subr.bf16.mxu0 %v1287
    %1353 = vmatpush1.bf16.msra.mxu0 %v1286
    %1354 = vmatprep.subr.bf16.mxu0 %v1283
    %1355 = vmatpush1.bf16.msra.mxu0 %v1282
    %1356 = vmatprep.subr.bf16.mxu0 %v1279
    %1357 = vmatpush1.bf16.msra.mxu0 %v1278
    %1358 = vmatprep.subr.bf16.mxu0 0
    %1359 = vmatpush2.bf16.msra.mxu0 0
    %1360 = vmatprep.subr.bf16.mxu0 0
    %1361 = vmatpush2.bf16.msra.mxu0 0
    %1362 = vmatprep.subr.bf16.mxu0 0
    %1363 = vmatpush2.bf16.msra.mxu0 0
    %1364 = vmatprep.subr.bf16.mxu0 0
    %1365 = vmatpush2.bf16.msra.mxu0 0
    %1366 = vmatprep.subr.bf16.mxu0 0
    %1367 = vmatpush2.bf16.msra.mxu0 0
    %1368 = vmatprep.subr.bf16.mxu0 0
    %1369 = vmatpush2.bf16.msra.mxu0 0
    %1370 = vmatprep.subr.bf16.mxu0 0
    %1371 = vmatpush2.bf16.msra.mxu0 0
    %1372 = vmatprep.subr.bf16.mxu0 0
    %1373 = vmatpush2.bf16.msra.mxu0 0
    %1374 = vmatprep.mubr.bf16.mxu0 0
    %1375 = vmatmul.mubr.bf16.gmra.mxu0 %v41
    %v1376 = vpop.f32.mrf.mxu0
    %v1377 = vadd.f32 0.0, %v1376
    %v1378 = vpop.f32.mrf.mxu0
    %v1379 = vadd.f32 0.0, %v1378
    %v1380 = vpop.f32.mrf.mxu0
    %v1381 = vpop.f32.mrf.mxu0
    %1382 = vdwg.mxu0
    %1383 = vmatprep.subr.bf16.mxu0 %v1309
    %1384 = vmatpush1.bf16.msra.mxu0 %v1308
    %1385 = vmatprep.subr.bf16.mxu0 %v1305
    %1386 = vmatpush1.bf16.msra.mxu0 %v1304
    %1387 = vmatprep.subr.bf16.mxu0 %v1301
    %1388 = vmatpush1.bf16.msra.mxu0 %v1300
    %1389 = vmatprep.subr.bf16.mxu0 %v1297
    %1390 = vmatpush1.bf16.msra.mxu0 %v1296
    %1391 = vmatprep.subr.bf16.mxu0 %v1293
    %1392 = vmatpush1.bf16.msra.mxu0 %v1292
    %1393 = vmatprep.subr.bf16.mxu0 %v1289
    %1394 = vmatpush1.bf16.msra.mxu0 %v1288
    %1395 = vmatprep.subr.bf16.mxu0 %v1285
    %1396 = vmatpush1.bf16.msra.mxu0 %v1284
    %1397 = vmatprep.subr.bf16.mxu0 %v1281
    %1398 = vmatpush1.bf16.msra.mxu0 %v1280
    %1399 = vmatprep.subr.bf16.mxu0 0
    %1400 = vmatpush2.bf16.msra.mxu0 0
    %1401 = vmatprep.subr.bf16.mxu0 0
    %1402 = vmatpush2.bf16.msra.mxu0 0
    %1403 = vmatprep.subr.bf16.mxu0 0
    %1404 = vmatpush2.bf16.msra.mxu0 0
    %1405 = vmatprep.subr.bf16.mxu0 0
    %1406 = vmatpush2.bf16.msra.mxu0 0
    %1407 = vmatprep.subr.bf16.mxu0 0
    %1408 = vmatpush2.bf16.msra.mxu0 0
    %1409 = vmatprep.subr.bf16.mxu0 0
    %1410 = vmatpush2.bf16.msra.mxu0 0
    %1411 = vmatprep.subr.bf16.mxu0 0
    %1412 = vmatpush2.bf16.msra.mxu0 0
    %1413 = vmatprep.subr.bf16.mxu0 0
    %1414 = vmatpush2.bf16.msra.mxu0 0
    %1415 = vmatprep.mubr.bf16.mxu0 0
    %1416 = vmatmul.mubr.bf16.gmra.mxu0 %v41
    %v1417 = vpop.f32.mrf.mxu0
    %v1418 = vadd.f32 0.0, %v1417
    %v1419 = vpop.f32.mrf.mxu0
    %v1420 = vadd.f32 0.0, %v1419
    %v1421 = vpop.f32.mrf.mxu0
    %v1422 = vpop.f32.mrf.mxu0
    %1423 = vdwg.mxu0
    %v1424 = vmax.f32 %v1146, %v1377
    %v1425 = vmax.f32 %v1147, %v1379
    %v1426 = vmax.f32 %v1148, %v1418
    %v1427 = vmax.f32 %v1149, %v1420
    %v1428 = vld [vmem:[%s3] sm:$0xf]
    %v1430 = vlaneseq
    %v1431 = vshrl.u32 %v1430, 7
    %v1432 = vsub.s32 0, %v1431
    %v1433 = vrot.slane %v1428, %v1432
    %v1434 = vlaneseq
    %v1435 = vshrl.u32 %v1434, 7
    %v1436 = vsub.s32 1, %v1435
    %v1437 = vrot.slane %v1428, %v1436
    %v1438 = vlaneseq
    %v1439 = vshrl.u32 %v1438, 7
    %v1440 = vsub.s32 2, %v1439
    %v1441 = vrot.slane %v1428, %v1440
    %v1442 = vlaneseq
    %v1443 = vshrl.u32 %v1442, 7
    %v1444 = vsub.s32 3, %v1443
    %v1445 = vrot.slane %v1428, %v1444
    %v1450 = vadd.f32 %v1424, %v1433
    %v1451 = vadd.f32 %v1425, %v1437
    %v1452 = vadd.f32 %v1426, %v1441
    %v1453 = vadd.f32 %v1427, %v1445
    %v1454 = vmax.f32 %v1450, 0.0
    %v1455 = vmax.f32 %v1451, 0.0
    %v1456 = vmax.f32 %v1452, 0.0
    %v1457 = vmax.f32 %v1453, 0.0
    %1458 = vst [vmem:[%s6] sm:$0xff] %v1454
    %1459 = vst [vmem:[%s6 + $0x8] sm:$0xff] %v1455
    %1460 = vst [vmem:[%s6 + $0x10] sm:$0xff] %v1456
    %1461 = vst [vmem:[%s6 + $0x18] sm:$0xff] %v1457
    %v1462 = vld [vmem:[%s1] sm:$0xff]
    %v1463 = vpack.c.bf16 %v1462, %v1462
    %v1464 = vld [vmem:[%s4] sm:$0xff]
    %v1465 = vld [vmem:[%s5] sm:$0x3]
    %v1467 = vlaneseq
    %v1468 = vshrl.u32 %v1467, 7
    %v1469 = vsub.s32 0, %v1468
    %v1470 = vrot.slane %v1465, %v1469
    %v1471 = vlaneseq
    %v1472 = vshrl.u32 %v1471, 7
    %v1473 = vsub.s32 1, %v1472
    %v1474 = vrot.slane %v1465, %v1473
    %v1478 = vunpack.c.l.b16 %v1464
    %v1479 = vunpack.c.h.b16 %v1464
    %v1480 = vpack.c.b16 %v1478, %v1478
    %v1481 = vpack.c.b16 %v1479, %v1479
    %vm1482 = vcmask 64512
    %v1484 = vsel %vm1482, %v1463, 0
    %vm1486 = vcmask 1043456
    %v1488 = vsel %vm1486, %v1480, 0
    %v1491 = vsel %vm1486, %v1481, 0
    %1493 = vmatprep.subr.bf16.mxu0 0
    %1494 = vmatpush1.bf16.msra.mxu0 0
    %1495 = vmatprep.subr.bf16.mxu0 0
    %1496 = vmatpush1.bf16.msra.mxu0 0
    %1497 = vmatprep.subr.bf16.mxu0 0
    %1498 = vmatpush1.bf16.msra.mxu0 0
    %1499 = vmatprep.subr.bf16.mxu0 0
    %1500 = vmatpush1.bf16.msra.mxu0 0
    %1501 = vmatprep.subr.bf16.mxu0 0
    %1502 = vmatpush1.bf16.msra.mxu0 0
    %1503 = vmatprep.subr.bf16.mxu0 0
    %1504 = vmatpush1.bf16.msra.mxu0 0
    %1505 = vmatprep.subr.bf16.mxu0 0
    %1506 = vmatpush1.bf16.msra.mxu0 0
    %1507 = vmatprep.subr.bf16.mxu0 %v1491
    %1508 = vmatpush1.bf16.msra.mxu0 %v1488
    %1509 = vmatprep.subr.bf16.mxu0 0
    %1510 = vmatpush2.bf16.msra.mxu0 0
    %1511 = vmatprep.subr.bf16.mxu0 0
    %1512 = vmatpush2.bf16.msra.mxu0 0
    %1513 = vmatprep.subr.bf16.mxu0 0
    %1514 = vmatpush2.bf16.msra.mxu0 0
    %1515 = vmatprep.subr.bf16.mxu0 0
    %1516 = vmatpush2.bf16.msra.mxu0 0
    %1517 = vmatprep.subr.bf16.mxu0 0
    %1518 = vmatpush2.bf16.msra.mxu0 0
    %1519 = vmatprep.subr.bf16.mxu0 0
    %1520 = vmatpush2.bf16.msra.mxu0 0
    %1521 = vmatprep.subr.bf16.mxu0 0
    %1522 = vmatpush2.bf16.msra.mxu0 0
    %1523 = vmatprep.subr.bf16.mxu0 0
    %1524 = vmatpush2.bf16.msra.mxu0 0
    %1525 = vmatprep.mubr.bf16.mxu0 0
    %1526 = vmatmul.mubr.bf16.gmra.mxu0 %v1484
    %v1527 = vpop.f32.mrf.mxu0
    %v1528 = vadd.f32 %v1470, %v1527
    %v1529 = vpop.f32.mrf.mxu0
    %v1530 = vadd.f32 %v1474, %v1529
    %v1531 = vpop.f32.mrf.mxu0
    %v1532 = vpop.f32.mrf.mxu0
    %1533 = vdwg.mxu0
    %1534 = vst [vmem:[%s7] sm:$0xff] %v1528
    %1535 = vst [vmem:[%s7 + $0x8] sm:$0xff] %v1530
    // Predicated region
    $region30: #{decoder_forward.1} parent=1 // pred_check
      _
    $region31: #{decoder_forward.1} parent=1 // pred_check_branch
      %1537 = sbr.rel (0) target = $region33
    $region32: #{decoder_forward.1} parent=1 // pred_region
      _
    $region33: #{decoder_forward.1} parent=1 // pred_fallthru
      _
    // Predicated region
    $region34: #{decoder_forward.1} parent=1 // pred_check
      _
    $region35: #{decoder_forward.1} parent=1 // pred_check_branch
      %1539 = sbr.rel (0) target = $region37
    $region36: #{decoder_forward.1} parent=1 // pred_region
      _
    $region37: #{decoder_forward.1} parent=1 // pred_fallthru
      _
    // Predicated region
    $region38: #{decoder_forward.1} parent=1 // pred_check
      _
    $region39: #{decoder_forward.1} parent=1 // pred_check_branch
      %1541 = sbr.rel (0) target = $region41
    $region40: #{decoder_forward.1} parent=1 // pred_region
      _
    $region41: #{decoder_forward.1} parent=1 // pred_fallthru
      _
    // Predicated region
    $region42: #{decoder_forward.1} parent=1 // pred_check
      _
    $region43: #{decoder_forward.1} parent=1 // pred_check_branch
      %1543 = sbr.rel (0) target = $region45
    $region44: #{decoder_forward.1} parent=1 // pred_region
      _
    $region45: #{decoder_forward.1} parent=1 // pred_fallthru
      _
    %1544 = vsyncpa [#allocation3], 1

</llo_original>
